<compile_context>
chip_gen: v7x
topology: tpu7x:2x2x1
jax: 0.10.0
libtpu: 0.0.40
codegen_flags: <defaults>
</compile_context>

<pallas_src>
import jax
import jax.numpy as jnp
import numpy as np
from jax.experimental import pallas as pl
from jax.experimental.pallas import tpu as pltpu


# --------------------------------------------------------------------------------------
# Stage 1: attention pooling + layer-1 linear  (batch-gridded, pipelined, lane-dense)
# --------------------------------------------------------------------------------------
def _stage1_kernel(de_ref, low_ref, high_ref,
                   wb1_ref, bb1_ref, phx1_ref,
                   wb2_ref, bb2_ref, phx2_ref,
                   sumsel_ref,
                   w1de_ref, w1wf_ref, b1_ref,
                   pre1_ref):
    E = sumsel_ref.shape[1]                         # static
    sumsel = sumsel_ref[...]                        # [P*E, E] 0/1 path-sum selector (f32)

    def attn_pool(flat_ref, wb_ref, bb_ref, phx_ref):
        flat = flat_ref[...]                        # [TB, P*E] (lane-dense)
        wb = wb_ref[...]                            # [P*E, P*F] block-diagonal attention W
        # one K=P*E matmul replaces P tiny per-path matmuls (no lane slicing)
        t = jnp.maximum(
            jnp.dot(flat.astype(wb.dtype), wb,
                    preferred_element_type=jnp.float32) + bb_ref[...], 0.0)   # [TB, P*F]
        # projection_h folded into [P*F, P*E]: each path's score lands already broadcast
        # over that path's E lanes, so softmax max/sum are single full-lane reduces.
        s = jnp.dot(t, phx_ref[...], preferred_element_type=jnp.float32)      # [TB, P*E]
        m = jnp.max(s, axis=-1, keepdims=True)      # max over lanes == max over paths
        e = jnp.exp(s - m)                          # each path's exp repeated E times
        inv = pl.reciprocal(jnp.sum(e, axis=-1, keepdims=True),
                            approx=True) * float(E)                            # 1/sum_p
        att = e * inv                               # softmax weights, path-broadcast
        weighted = flat.astype(jnp.float32) * att   # [TB, P*E]
        # pooled[b, e] = sum_p att[b, p] * flat[b, p*E + e]  -> lane-dense matmul
        return jnp.dot(weighted, sumsel, preferred_element_type=jnp.float32)   # [TB, E]

    o1 = attn_pool(low_ref, wb1_ref, bb1_ref, phx1_ref)
    o2 = attn_pool(high_ref, wb2_ref, bb2_ref, phx2_ref)
    workflow = o1 * o2                              # [TB, E]

    # layer-1 without any in-kernel concat: split weight, accumulate in f32
    w1de = w1de_ref[...]                            # [2E, H1p]
    w1wf = w1wf_ref[...]                            # [E, H1p]
    pre1_ref[...] = (
        jnp.dot(de_ref[...].astype(w1de.dtype), w1de, preferred_element_type=jnp.float32)
        + jnp.dot(workflow.astype(w1wf.dtype), w1wf, preferred_element_type=jnp.float32)
        + b1_ref[...])                              # [TB, H1p] lane-dense store


# --------------------------------------------------------------------------------------
# Stage 2: BatchNorm (full-batch statistics) MLP + exact sigmoid  (single grid point)
# --------------------------------------------------------------------------------------
def _stage2_kernel(pre1_ref,
                   g1_ref, bt1_ref,
                   w2_ref, b2_ref, g2_ref, bt2_ref,
                   w3_ref, b3_ref, g3_ref, bt3_ref,
                   w4_ref, b4_ref, g4_ref, bt4_ref,
                   w5_ref, b5_ref,
                   out_ref):
    def bn_relu(v, g_ref, bt_ref, eps=1e-5):
        # training-mode BatchNorm1d: batch mean, biased variance (f32 math)
        mean = jnp.mean(v, axis=0, keepdims=True)
        var = jnp.mean((v - mean) ** 2, axis=0, keepdims=True)
        y = g_ref[...] * (v - mean) * jax.lax.rsqrt(var + eps) + bt_ref[...]
        return jnp.maximum(y, 0.0)

    def linear(h, w_ref, b_ref):
        W = w_ref[...]
        return jnp.dot(h.astype(W.dtype), W,
                       preferred_element_type=jnp.float32) + b_ref[...]

    h = bn_relu(pre1_ref[...], g1_ref, bt1_ref)
    h = bn_relu(linear(h, w2_ref, b2_ref), g2_ref, bt2_ref)
    h = bn_relu(linear(h, w3_ref, b3_ref), g3_ref, bt3_ref)
    h = bn_relu(linear(h, w4_ref, b4_ref), g4_ref, bt4_ref)

    logits = linear(h, w5_ref, b5_ref)              # [B, OUT_PAD] lane-dense
    # exact, numerically-stable sigmoid (no approx reciprocal on the model output)
    e = jnp.exp(-jnp.abs(logits))
    denom = 1.0 + e
    out_ref[...] = jnp.where(logits >= 0.0, 1.0 / denom, e / denom)


# --------------------------------------------------------------------------------------
# Wrapper helpers
# --------------------------------------------------------------------------------------
def _vmem_capacity_bytes():
    try:
        info = pltpu.get_tpu_info()
        cap = getattr(info, "vmem_capacity_bytes", None)
        if cap:
            return int(cap)
    except Exception:
        pass
    return 64 * 1024 * 1024  # conservative default (v7x)


def _choose_batch_tile(B, row_bytes, budget, max_tb, min_tb):
    cands = [t for t in (4096, 2048, 1024, 512, 256, 128, 64, 32, 16, 8)
             if min_tb <= t <= max_tb]
    for tb in cands:
        if B % tb == 0 and 2 * tb * row_bytes <= budget:
            return tb
    # fallback: largest multiple-of-min_tb divisor of B that fits the budget
    best = None
    tb = min_tb
    while tb <= min(B, max_tb):
        if B % tb == 0 and 2 * tb * row_bytes <= budget:
            best = tb
        tb += min_tb
    return best if best is not None else B


def _block_diag(W, P):
    # [E, F] -> block-diagonal [P*E, P*F] (same W on every diagonal block)
    E, F = W.shape
    out = jnp.zeros((P * E, P * F), W.dtype)
    for p in range(P):
        out = out.at[p * E:(p + 1) * E, p * F:(p + 1) * F].set(W)
    return out


def _ph_expand(ph, P, E):
    # ph [1, F] -> [P*F, P*E]: block p maps that path's F features to its score,
    # replicated across the path's E lanes.
    F = ph.shape[-1]
    blk = jnp.broadcast_to(ph.reshape(F, 1), (F, E)).astype(jnp.float32)
    out = jnp.zeros((P * F, P * E), jnp.float32)
    for p in range(P):
        out = out.at[p * F:(p + 1) * F, p * E:(p + 1) * E].set(blk)
    return out


def _bspec(shape, imap, buffers=None):
    if buffers is None:
        return pl.BlockSpec(shape, imap)
    return pl.BlockSpec(shape, imap, pipeline_mode=pl.Buffered(buffers))


# --------------------------------------------------------------------------------------
# Wrapper
# --------------------------------------------------------------------------------------
def mdp_net_forward(x, params, *, matmul_dtype=jnp.float32, batch_tile=None,
                    input_buffers=None):
    (aW1, ab1, ph1, aW2, ab2, ph2,
     w1, b1, g1, bt1, w2, b2, g2, bt2,
     w3, b3, g3, bt3, w4, b4, g4, bt4,
     w5, b5) = params

    B, S, E = x.shape
    P = (S - 2) // 2
    F_att = aW1.shape[1]
    H1, H2, H3, H4 = w1.shape[1], w2.shape[1], w3.shape[1], w4.shape[1]
    out_dim = w5.shape[1]
    f32 = jnp.float32
    itemsize_in = np.dtype(matmul_dtype).itemsize

    # ---- layout plumbing: clean 2-D, lane-aligned inputs (bf16 DMA on the bf16 path) ----
    demand_ext = x[:, 0:2, :].reshape(B, 2 * E).astype(matmul_dtype)   # [B, 2E]
    low = x[:, 2:2 + P, :].reshape(B, P * E).astype(matmul_dtype)      # [B, P*E]
    high = x[:, 2 + P:, :].reshape(B, P * E).astype(matmul_dtype)      # [B, P*E]

    # attention weights: block-diagonal matmul form + lane-broadcast projection matrix
    wb1 = _block_diag(aW1, P).astype(matmul_dtype)                     # [P*E, P*F]
    wb2 = _block_diag(aW2, P).astype(matmul_dtype)
    bb1 = jnp.tile(ab1, (1, P)).astype(f32)                            # [1, P*F]
    bb2 = jnp.tile(ab2, (1, P)).astype(f32)
    phx1 = _ph_expand(ph1, P, E)                                       # [P*F, P*E]
    phx2 = _ph_expand(ph2, P, E)
    sumsel = jnp.tile(jnp.eye(E, dtype=f32), (P, 1))                   # [P*E, E]

    # layer-1: split (no in-kernel concat) and pad the output width to 128 lanes
    H1p = ((H1 + 127) // 128) * 128
    w1p = jnp.zeros((3 * E, H1p), f32).at[:, :H1].set(w1)
    w1_de = w1p[:2 * E, :].astype(matmul_dtype)                        # [2E, H1p]
    w1_wf = w1p[2 * E:, :].astype(matmul_dtype)                        # [E, H1p]
    b1p = jnp.zeros((1, H1p), f32).at[:, :H1].set(b1)
    g1p = jnp.zeros((1, H1p), f32).at[:, :H1].set(g1)                  # zero gamma on pad
    bt1p = jnp.zeros((1, H1p), f32).at[:, :H1].set(bt1)
    w2p = jnp.zeros((H1p, H2), f32).at[:H1, :].set(w2).astype(matmul_dtype)
    w3m, w4m = w3.astype(matmul_dtype), w4.astype(matmul_dtype)

    # pad the final layer to a lane-dense output width
    out_pad = ((out_dim + 127) // 128) * 128
    w5p = jnp.zeros((w5.shape[0], out_pad), f32).at[:, :out_dim].set(w5).astype(matmul_dtype)
    b5p = jnp.zeros((1, out_pad), f32).at[:, :out_dim].set(b5)

    # ---- generation-aware VMEM budget / batch tiling ----
    vmem_cap = _vmem_capacity_bytes()
    if vmem_cap >= 128 * 1024 * 1024:          # v5e / v6e: 128 MiB VMEM, big tiles
        vmem_limit = 48 * 1024 * 1024
        tile_budget = 28 * 1024 * 1024
        max_tb = 4096
    else:                                      # v7x: 64 MiB physical, stay conservative
        vmem_limit = 36 * 1024 * 1024
        tile_budget = 8 * 1024 * 1024
        max_tb = 1024

    min_tb = 16 if itemsize_in < 4 else 8
    row_bytes = itemsize_in * (2 * E + 2 * P * E) + 4 * H1p
    if batch_tile is None:
        batch_tile = _choose_batch_tile(B, row_bytes, tile_budget, max_tb, min_tb)
    TB = batch_tile
    assert B % TB == 0, "batch tile must divide B"
    grid = (B // TB,)

    flops = int(B * (2 * 2 * (P * E) * (P * F_att)       # block-diag attention matmuls
                     + 2 * 2 * (P * F_att) * (P * E)      # projection/score matmuls
                     + 2 * 2 * (P * E) * E                # pooling selector matmuls
                     + 2 * (2 * E) * H1p + 2 * E * H1p    # layer-1
                     + 10 * P * E))                       # VPU epilogue
    transcendentals = int(2 * B * (P * E + 1))
    bytes_accessed = int(itemsize_in * B * (2 * E + 2 * P * E)
                         + itemsize_in * (wb1.size + wb2.size + w1_de.size + w1_wf.size)
                         + 4 * (bb1.size + bb2.size + phx1.size + phx2.size
                                + sumsel.size + b1p.size)
                         + 4 * B * H1p)

    const = lambda shape: pl.BlockSpec(shape, lambda i: (0, 0))   # VMEM-resident weights

    pre1 = pl.pallas_call(
        _stage1_kernel,
        out_shape=jax.ShapeDtypeStruct((B, H1p), jnp.float32),
        grid=grid,
        in_specs=[
            _bspec((TB, 2 * E), lambda i: (i, 0), input_buffers),     # demand+external
            _bspec((TB, P * E), lambda i: (i, 0), input_buffers),     # low-level paths
            _bspec((TB, P * E), lambda i: (i, 0), input_buffers),     # high-level paths
            const((P * E, P * F_att)), const((1, P * F_att)), const((P * F_att, P * E)),
            const((P * E, P * F_att)), const((1, P * F_att)), const((P * F_att, P * E)),
            const((P * E, E)),                                        # pooling selector
            const((2 * E, H1p)), const((E, H1p)), const((1, H1p)),    # layer-1
        ],
        out_specs=pl.BlockSpec((TB, H1p), lambda i: (i, 0)),          # lane-dense store
        compiler_params=pltpu.CompilerParams(
            dimension_semantics=("parallel",),
            vmem_limit_bytes=vmem_limit),
        cost_estimate=pl.CostEstimate(
            flops=flops, transcendentals=transcendentals, bytes_accessed=bytes_accessed),
    )(demand_ext, low, high, wb1, bb1, phx1, wb2, bb2, phx2, sumsel,
      w1_de, w1_wf, b1p)

    # ---- stage 2: full-batch BatchNorm MLP (batch stats need the whole batch) ----
    act_bytes = 4 * B * (H1p + H2 + H3 + H4 + out_pad)
    wgt_bytes = (itemsize_in * (w2p.size + w3m.size + w4m.size + w5p.size)
                 + 4 * (g1p.size + bt1p.size + b2.size + g2.size + bt2.size + b3.size
                        + g3.size + bt3.size + b4.size + g4.size + bt4.size + b5p.size))
    if 2 * act_bytes + wgt_bytes > int(0.7 * vmem_limit):
        # TODO(synk): restructure stage 2 as a two-pass batch-gridded BatchNorm
        # (pass A: per-tile sum/sumsq accumulation; pass B: normalize+matmul,
        #  megacore-parallel) so large B / v7x does not need full-batch VMEM residency.
        raise ValueError(
            "stage-2 full-batch BatchNorm working set does not fit VMEM for this batch "
            "size; reduce B or implement the two-pass batch-gridded stage 2.")

    vspec = pl.BlockSpec(memory_space=pltpu.MemorySpace.VMEM)
    stage2_args = (pre1, g1p, bt1p, w2p, b2, g2, bt2, w3m, b3, g3, bt3,
                   w4m, b4, g4, bt4, w5p, b5p)
    out_padded = pl.pallas_call(
        _stage2_kernel,
        out_shape=jax.ShapeDtypeStruct((B, out_pad), jnp.float32),
        in_specs=[vspec] * len(stage2_args),
        out_specs=vspec,
        compiler_params=pltpu.CompilerParams(vmem_limit_bytes=vmem_limit),
    )(*stage2_args)

    return out_padded[:, :out_dim]


# ----------------------------- parameter init (deterministic) -----------------------------
def init_params(key, E, F_att, H1, H2, H3, H4, out_dim):
    def xavier(k, shape):
        std = float(np.sqrt(2.0 / (shape[0] + shape[1])))
        return std * jax.random.normal(k, shape, jnp.float32)

    def linear(k, din, dout):
        bound = float(1.0 / np.sqrt(din))
        kw, kb = jax.random.split(k)
        W = jax.random.uniform(kw, (din, dout), jnp.float32, -bound, bound)
        b = jax.random.uniform(kb, (1, dout), jnp.float32, -bound, bound)
        return W, b

    ks = jax.random.split(key, 9)
    aW1 = xavier(ks[0], (E, F_att)); ab1 = jnp.zeros((1, F_att), jnp.float32); ph1 = xavier(ks[1], (1, F_att))
    aW2 = xavier(ks[2], (E, F_att)); ab2 = jnp.zeros((1, F_att), jnp.float32); ph2 = xavier(ks[3], (1, F_att))

    w1, b1 = linear(ks[4], 3 * E, H1); g1 = jnp.ones((1, H1), jnp.float32); bt1 = jnp.zeros((1, H1), jnp.float32)
    w2, b2 = linear(ks[5], H1, H2);    g2 = jnp.ones((1, H2), jnp.float32); bt2 = jnp.zeros((1, H2), jnp.float32)
    w3, b3 = linear(ks[6], H2, H3);    g3 = jnp.ones((1, H3), jnp.float32); bt3 = jnp.zeros((1, H3), jnp.float32)
    w4, b4 = linear(ks[7], H3, H4);    g4 = jnp.ones((1, H4), jnp.float32); bt4 = jnp.zeros((1, H4), jnp.float32)
    w5, b5 = linear(ks[8], H4, out_dim)

    return (aW1, ab1, ph1, aW2, ab2, ph2,
            w1, b1, g1, bt1, w2, b2, g2, bt2,
            w3, b3, g3, bt3, w4, b4, g4, bt4,
            w5, b5)


# ----------------------------- pure-JAX reference for verification -----------------------------
def reference_forward(x, params):
    (aW1, ab1, ph1, aW2, ab2, ph2,
     w1, b1, g1, bt1, w2, b2, g2, bt2,
     w3, b3, g3, bt3, w4, b4, g4, bt4,
     w5, b5) = params
    B, S, E = x.shape
    P = (S - 2) // 2

    def attn(a, W, b, ph):
        t = jax.nn.relu(jnp.einsum('bpe,ef->bpf', a, W) + b)
        s = jnp.sum(t * ph, axis=-1)
        att = jax.nn.softmax(s, axis=1)
        return jnp.sum(att[:, :, None] * a, axis=1)

    o1 = attn(x[:, 2:2 + P, :], aW1, ab1, ph1)
    o2 = attn(x[:, 2 + P:, :], aW2, ab2, ph2)
    workflow = o1 * o2
    pred = jnp.concatenate([x[:, 0, :], x[:, 1, :], workflow], axis=1)

    def bn(v, g, bt, eps=1e-5):
        m = jnp.mean(v, axis=0, keepdims=True)
        var = jnp.mean((v - m) ** 2, axis=0, keepdims=True)
        return g * (v - m) / jnp.sqrt(var + eps) + bt

    h = jax.nn.relu(bn(pred @ w1 + b1, g1, bt1))
    h = jax.nn.relu(bn(h @ w2 + b2, g2, bt2))
    h = jax.nn.relu(bn(h @ w3 + b3, g3, bt3))
    h = jax.nn.relu(bn(h @ w4 + b4, g4, bt4))
    return jax.nn.sigmoid(h @ w5 + b5)


if __name__ == "__main__":
    # Small shapes consistent with the module:
    B, E, F_att = 32, 32, 16
    path_num = 4
    S = 2 + 2 * path_num                 # demand + external + 2*path_num workflow rows
    H1, H2, H3, H4, OUT = 32, 32, 16, 16, 1

    key = jax.random.PRNGKey(0)
    kx, kp = jax.random.split(key)
    x = jax.random.normal(kx, (B, S, E), jnp.float32)
    params = init_params(kp, E, F_att, H1, H2, H3, H4, OUT)

    # f32 path; force a multi-step batch grid (TB=8 -> 4 pipelined grid steps)
    out = mdp_net_forward(x, params, batch_tile=8)
    out = jax.block_until_ready(out)

    ref = reference_forward(x, params)
    # tolerance accounts for the EUP approximate reciprocal in the softmax denominator
    np.testing.assert_allclose(np.asarray(out), np.asarray(ref), rtol=5e-3, atol=5e-3)

    # bf16 MXU-operand + bf16 input-DMA path (v6e/v7x recommendation): loose accuracy
    # check vs the f32 reference (sigmoid outputs in [0,1]); calibrated deployments
    # should validate this tolerance on real data.
    out_bf16 = mdp_net_forward(x, params, matmul_dtype=jnp.bfloat16, batch_tile=16)
    out_bf16 = jax.block_until_ready(out_bf16)
    ob = np.asarray(out_bf16)
    assert np.all(np.isfinite(ob)) and np.all(ob >= 0.0) and np.all(ob <= 1.0)
    assert float(np.max(np.abs(ob - np.asarray(ref)))) < 0.1, "bf16 path deviates too much"

    print("KERNEL_OK")
</pallas_src>

<mosaic_0001>
module attributes {stable_mosaic.version = 11 : i64} {
  func.func @_stage1_kernel(%arg0: i32, %arg1: memref<8x64xf32, #tpu.memory_space<vmem>>, %arg2: memref<8x128xf32, #tpu.memory_space<vmem>>, %arg3: memref<8x128xf32, #tpu.memory_space<vmem>>, %arg4: memref<128x64xf32, #tpu.memory_space<vmem>>, %arg5: memref<1x64xf32, #tpu.memory_space<vmem>>, %arg6: memref<64x128xf32, #tpu.memory_space<vmem>>, %arg7: memref<128x64xf32, #tpu.memory_space<vmem>>, %arg8: memref<1x64xf32, #tpu.memory_space<vmem>>, %arg9: memref<64x128xf32, #tpu.memory_space<vmem>>, %arg10: memref<128x32xf32, #tpu.memory_space<vmem>>, %arg11: memref<64x128xf32, #tpu.memory_space<vmem>>, %arg12: memref<32x128xf32, #tpu.memory_space<vmem>>, %arg13: memref<1x128xf32, #tpu.memory_space<vmem>>, %arg14: memref<8x128xf32, #tpu.memory_space<vmem>>) attributes {dimension_semantics = [#tpu.dimension_semantics<parallel>], iteration_bounds = array<i64: 4>, scalar_prefetch = 0 : i64, scratch_operands = 0 : i64, tpu.core_type = #tpu.core_type<tc>, window_params = [{transform_indices = @transform_0, window_bounds = array<i64: 8, 64>}, {transform_indices = @transform_1, window_bounds = array<i64: 8, 128>}, {transform_indices = @transform_2, window_bounds = array<i64: 8, 128>}, {pipeline_mode = #tpu.pipeline_mode<synchronous>, transform_indices = @transform_3, window_bounds = array<i64: 128, 64>}, {pipeline_mode = #tpu.pipeline_mode<synchronous>, transform_indices = @transform_4, window_bounds = array<i64: 1, 64>}, {pipeline_mode = #tpu.pipeline_mode<synchronous>, transform_indices = @transform_5, window_bounds = array<i64: 64, 128>}, {pipeline_mode = #tpu.pipeline_mode<synchronous>, transform_indices = @transform_6, window_bounds = array<i64: 128, 64>}, {pipeline_mode = #tpu.pipeline_mode<synchronous>, transform_indices = @transform_7, window_bounds = array<i64: 1, 64>}, {pipeline_mode = #tpu.pipeline_mode<synchronous>, transform_indices = @transform_8, window_bounds = array<i64: 64, 128>}, {pipeline_mode = #tpu.pipeline_mode<synchronous>, transform_indices = @transform_9, window_bounds = array<i64: 128, 32>}, {pipeline_mode = #tpu.pipeline_mode<synchronous>, transform_indices = @transform_10, window_bounds = array<i64: 64, 128>}, {pipeline_mode = #tpu.pipeline_mode<synchronous>, transform_indices = @transform_11, window_bounds = array<i64: 32, 128>}, {pipeline_mode = #tpu.pipeline_mode<synchronous>, transform_indices = @transform_12, window_bounds = array<i64: 1, 128>}, {transform_indices = @transform_13, window_bounds = array<i64: 8, 128>}]} {
    %c0 = arith.constant 0 : index
    %c0_0 = arith.constant 0 : index
    %0 = vector.load %arg10[%c0, %c0_0] : memref<128x32xf32, #tpu.memory_space<vmem>>, vector<128x32xf32>
    %c0_1 = arith.constant 0 : index
    %c0_2 = arith.constant 0 : index
    %1 = vector.load %arg2[%c0_1, %c0_2] : memref<8x128xf32, #tpu.memory_space<vmem>>, vector<8x128xf32>
    %c0_3 = arith.constant 0 : index
    %c0_4 = arith.constant 0 : index
    %2 = vector.load %arg4[%c0_3, %c0_4] : memref<128x64xf32, #tpu.memory_space<vmem>>, vector<128x64xf32>
    %cst = arith.constant dense<0.000000e+00> : vector<8x64xf32>
    %3 = tpu.matmul %1, %2, %cst {dimension_numbers = #tpu.dot_dimension_numbers<[1], [0], [0], [1], [0, 0, 1, 1], [], []>} : vector<8x128xf32>, vector<128x64xf32>, vector<8x64xf32> -> vector<8x64xf32>
    %c0_5 = arith.constant 0 : index
    %c0_6 = arith.constant 0 : index
    %4 = vector.load %arg5[%c0_5, %c0_6] : memref<1x64xf32, #tpu.memory_space<vmem>>, vector<1x64xf32>
    %5 = vector.broadcast %4 : vector<1x64xf32> to vector<8x64xf32>
    %6 = arith.addf %3, %5 : vector<8x64xf32>
    %cst_7 = arith.constant 0.000000e+00 : f32
    %7 = vector.broadcast %cst_7 : f32 to vector<8x64xf32>
    %8 = arith.maximumf %6, %7 : vector<8x64xf32>
    %c0_8 = arith.constant 0 : index
    %c0_9 = arith.constant 0 : index
    %9 = vector.load %arg6[%c0_8, %c0_9] : memref<64x128xf32, #tpu.memory_space<vmem>>, vector<64x128xf32>
    %cst_10 = arith.constant dense<0.000000e+00> : vector<8x128xf32>
    %10 = tpu.matmul %8, %9, %cst_10 {dimension_numbers = #tpu.dot_dimension_numbers<[1], [0], [0], [1], [0, 0, 1, 1], [], []>} : vector<8x64xf32>, vector<64x128xf32>, vector<8x128xf32> -> vector<8x128xf32>
    %cst_11 = arith.constant dense<0xFF800000> : vector<8xf32>
    %11 = vector.multi_reduction <maximumf>, %10, %cst_11 [1] : vector<8x128xf32> to vector<8xf32>
    %12 = vector.shape_cast %11 : vector<8xf32> to vector<8x1xf32>
    %13 = vector.broadcast %12 : vector<8x1xf32> to vector<8x128xf32>
    %14 = arith.subf %10, %13 : vector<8x128xf32>
    %15 = math.exp %14 : vector<8x128xf32>
    %cst_12 = arith.constant dense<0.000000e+00> : vector<8xf32>
    %16 = vector.multi_reduction <add>, %15, %cst_12 [1] : vector<8x128xf32> to vector<8xf32>
    %17 = vector.shape_cast %16 : vector<8xf32> to vector<8x1xf32>
    %18 = tpu.reciprocal %17 {approx = true} : vector<8x1xf32> -> vector<8x1xf32>
    %cst_13 = arith.constant 3.200000e+01 : f32
    %19 = vector.broadcast %cst_13 : f32 to vector<8x1xf32>
    %20 = arith.mulf %18, %19 : vector<8x1xf32>
    %21 = vector.broadcast %20 : vector<8x1xf32> to vector<8x128xf32>
    %22 = arith.mulf %15, %21 : vector<8x128xf32>
    %23 = arith.mulf %1, %22 : vector<8x128xf32>
    %cst_14 = arith.constant dense<0.000000e+00> : vector<8x32xf32>
    %24 = tpu.matmul %23, %0, %cst_14 {dimension_numbers = #tpu.dot_dimension_numbers<[1], [0], [0], [1], [0, 0, 1, 1], [], []>} : vector<8x128xf32>, vector<128x32xf32>, vector<8x32xf32> -> vector<8x32xf32>
    %c0_15 = arith.constant 0 : index
    %c0_16 = arith.constant 0 : index
    %25 = vector.load %arg3[%c0_15, %c0_16] : memref<8x128xf32, #tpu.memory_space<vmem>>, vector<8x128xf32>
    %c0_17 = arith.constant 0 : index
    %c0_18 = arith.constant 0 : index
    %26 = vector.load %arg7[%c0_17, %c0_18] : memref<128x64xf32, #tpu.memory_space<vmem>>, vector<128x64xf32>
    %cst_19 = arith.constant dense<0.000000e+00> : vector<8x64xf32>
    %27 = tpu.matmul %25, %26, %cst_19 {dimension_numbers = #tpu.dot_dimension_numbers<[1], [0], [0], [1], [0, 0, 1, 1], [], []>} : vector<8x128xf32>, vector<128x64xf32>, vector<8x64xf32> -> vector<8x64xf32>
    %c0_20 = arith.constant 0 : index
    %c0_21 = arith.constant 0 : index
    %28 = vector.load %arg8[%c0_20, %c0_21] : memref<1x64xf32, #tpu.memory_space<vmem>>, vector<1x64xf32>
    %29 = vector.broadcast %28 : vector<1x64xf32> to vector<8x64xf32>
    %30 = arith.addf %27, %29 : vector<8x64xf32>
    %cst_22 = arith.constant 0.000000e+00 : f32
    %31 = vector.broadcast %cst_22 : f32 to vector<8x64xf32>
    %32 = arith.maximumf %30, %31 : vector<8x64xf32>
    %c0_23 = arith.constant 0 : index
    %c0_24 = arith.constant 0 : index
    %33 = vector.load %arg9[%c0_23, %c0_24] : memref<64x128xf32, #tpu.memory_space<vmem>>, vector<64x128xf32>
    %cst_25 = arith.constant dense<0.000000e+00> : vector<8x128xf32>
    %34 = tpu.matmul %32, %33, %cst_25 {dimension_numbers = #tpu.dot_dimension_numbers<[1], [0], [0], [1], [0, 0, 1, 1], [], []>} : vector<8x64xf32>, vector<64x128xf32>, vector<8x128xf32> -> vector<8x128xf32>
    %cst_26 = arith.constant dense<0xFF800000> : vector<8xf32>
    %35 = vector.multi_reduction <maximumf>, %34, %cst_26 [1] : vector<8x128xf32> to vector<8xf32>
    %36 = vector.shape_cast %35 : vector<8xf32> to vector<8x1xf32>
    %37 = vector.broadcast %36 : vector<8x1xf32> to vector<8x128xf32>
    %38 = arith.subf %34, %37 : vector<8x128xf32>
    %39 = math.exp %38 : vector<8x128xf32>
    %cst_27 = arith.constant dense<0.000000e+00> : vector<8xf32>
    %40 = vector.multi_reduction <add>, %39, %cst_27 [1] : vector<8x128xf32> to vector<8xf32>
    %41 = vector.shape_cast %40 : vector<8xf32> to vector<8x1xf32>
    %42 = tpu.reciprocal %41 {approx = true} : vector<8x1xf32> -> vector<8x1xf32>
    %cst_28 = arith.constant 3.200000e+01 : f32
    %43 = vector.broadcast %cst_28 : f32 to vector<8x1xf32>
    %44 = arith.mulf %42, %43 : vector<8x1xf32>
    %45 = vector.broadcast %44 : vector<8x1xf32> to vector<8x128xf32>
    %46 = arith.mulf %39, %45 : vector<8x128xf32>
    %47 = arith.mulf %25, %46 : vector<8x128xf32>
    %cst_29 = arith.constant dense<0.000000e+00> : vector<8x32xf32>
    %48 = tpu.matmul %47, %0, %cst_29 {dimension_numbers = #tpu.dot_dimension_numbers<[1], [0], [0], [1], [0, 0, 1, 1], [], []>} : vector<8x128xf32>, vector<128x32xf32>, vector<8x32xf32> -> vector<8x32xf32>
    %49 = arith.mulf %24, %48 : vector<8x32xf32>
    %c0_30 = arith.constant 0 : index
    %c0_31 = arith.constant 0 : index
    %50 = vector.load %arg11[%c0_30, %c0_31] : memref<64x128xf32, #tpu.memory_space<vmem>>, vector<64x128xf32>
    %c0_32 = arith.constant 0 : index
    %c0_33 = arith.constant 0 : index
    %51 = vector.load %arg12[%c0_32, %c0_33] : memref<32x128xf32, #tpu.memory_space<vmem>>, vector<32x128xf32>
    %c0_34 = arith.constant 0 : index
    %c0_35 = arith.constant 0 : index
    %52 = vector.load %arg1[%c0_34, %c0_35] : memref<8x64xf32, #tpu.memory_space<vmem>>, vector<8x64xf32>
    %cst_36 = arith.constant dense<0.000000e+00> : vector<8x128xf32>
    %53 = tpu.matmul %52, %50, %cst_36 {dimension_numbers = #tpu.dot_dimension_numbers<[1], [0], [0], [1], [0, 0, 1, 1], [], []>} : vector<8x64xf32>, vector<64x128xf32>, vector<8x128xf32> -> vector<8x128xf32>
    %cst_37 = arith.constant dense<0.000000e+00> : vector<8x128xf32>
    %54 = tpu.matmul %49, %51, %cst_37 {dimension_numbers = #tpu.dot_dimension_numbers<[1], [0], [0], [1], [0, 0, 1, 1], [], []>} : vector<8x32xf32>, vector<32x128xf32>, vector<8x128xf32> -> vector<8x128xf32>
    %55 = arith.addf %53, %54 : vector<8x128xf32>
    %c0_38 = arith.constant 0 : index
    %c0_39 = arith.constant 0 : index
    %56 = vector.load %arg13[%c0_38, %c0_39] : memref<1x128xf32, #tpu.memory_space<vmem>>, vector<1x128xf32>
    %57 = vector.broadcast %56 : vector<1x128xf32> to vector<8x128xf32>
    %58 = arith.addf %55, %57 : vector<8x128xf32>
    %c0_40 = arith.constant 0 : index
    %c0_41 = arith.constant 0 : index
    %59 = vector.load %arg14[%c0_40, %c0_41] : memref<8x128xf32, #tpu.memory_space<vmem>>, vector<8x128xf32>
    tpu.vector_store %arg14[%c0_40, %c0_41], %58 {strides = array<i32>} : memref<8x128xf32, #tpu.memory_space<vmem>>, vector<8x128xf32>,
    return
  }
  func.func @transform_0(%arg0: i32) -> (i32, i32) {
    %c0_i32 = arith.constant 0 : i32
    %c0_i32_0 = arith.constant 0 : i32
    return %arg0, %c0_i32 : i32, i32
  }
  func.func @transform_1(%arg0: i32) -> (i32, i32) {
    %c0_i32 = arith.constant 0 : i32
    %c0_i32_0 = arith.constant 0 : i32
    return %arg0, %c0_i32 : i32, i32
  }
  func.func @transform_2(%arg0: i32) -> (i32, i32) {
    %c0_i32 = arith.constant 0 : i32
    %c0_i32_0 = arith.constant 0 : i32
    return %arg0, %c0_i32 : i32, i32
  }
  func.func @transform_3(%arg0: i32) -> (i32, i32) {
    %c0_i32 = arith.constant 0 : i32
    %c0_i32_0 = arith.constant 0 : i32
    %c0_i32_1 = arith.constant 0 : i32
    return %c0_i32, %c0_i32_0 : i32, i32
  }
  func.func @transform_4(%arg0: i32) -> (i32, i32) {
    %c0_i32 = arith.constant 0 : i32
    %c0_i32_0 = arith.constant 0 : i32
    %c0_i32_1 = arith.constant 0 : i32
    return %c0_i32, %c0_i32_0 : i32, i32
  }
  func.func @transform_5(%arg0: i32) -> (i32, i32) {
    %c0_i32 = arith.constant 0 : i32
    %c0_i32_0 = arith.constant 0 : i32
    %c0_i32_1 = arith.constant 0 : i32
    return %c0_i32, %c0_i32_0 : i32, i32
  }
  func.func @transform_6(%arg0: i32) -> (i32, i32) {
    %c0_i32 = arith.constant 0 : i32
    %c0_i32_0 = arith.constant 0 : i32
    %c0_i32_1 = arith.constant 0 : i32
    return %c0_i32, %c0_i32_0 : i32, i32
  }
  func.func @transform_7(%arg0: i32) -> (i32, i32) {
    %c0_i32 = arith.constant 0 : i32
    %c0_i32_0 = arith.constant 0 : i32
    %c0_i32_1 = arith.constant 0 : i32
    return %c0_i32, %c0_i32_0 : i32, i32
  }
  func.func @transform_8(%arg0: i32) -> (i32, i32) {
    %c0_i32 = arith.constant 0 : i32
    %c0_i32_0 = arith.constant 0 : i32
    %c0_i32_1 = arith.constant 0 : i32
    return %c0_i32, %c0_i32_0 : i32, i32
  }
  func.func @transform_9(%arg0: i32) -> (i32, i32) {
    %c0_i32 = arith.constant 0 : i32
    %c0_i32_0 = arith.constant 0 : i32
    %c0_i32_1 = arith.constant 0 : i32
    return %c0_i32, %c0_i32_0 : i32, i32
  }
  func.func @transform_10(%arg0: i32) -> (i32, i32) {
    %c0_i32 = arith.constant 0 : i32
    %c0_i32_0 = arith.constant 0 : i32
    %c0_i32_1 = arith.constant 0 : i32
    return %c0_i32, %c0_i32_0 : i32, i32
  }
  func.func @transform_11(%arg0: i32) -> (i32, i32) {
    %c0_i32 = arith.constant 0 : i32
    %c0_i32_0 = arith.constant 0 : i32
    %c0_i32_1 = arith.constant 0 : i32
    return %c0_i32, %c0_i32_0 : i32, i32
  }
  func.func @transform_12(%arg0: i32) -> (i32, i32) {
    %c0_i32 = arith.constant 0 : i32
    %c0_i32_0 = arith.constant 0 : i32
    %c0_i32_1 = arith.constant 0 : i32
    return %c0_i32, %c0_i32_0 : i32, i32
  }
  func.func @transform_13(%arg0: i32) -> (i32, i32) {
    %c0_i32 = arith.constant 0 : i32
    %c0_i32_0 = arith.constant 0 : i32
    return %arg0, %c0_i32 : i32, i32
  }
}

</mosaic_0001>

<llo_original>
// kernel: tpu_custom_call.1
$region0: #{tpu_custom_call.1}
  #allocation0 [shape = 'u32[]', space=smem, size = 0x4, offset = 0x4, fixed_abs, tag = 'smem constant byte address 0x4 - core index']
  #allocation1 [shape = 'u32[144,128]{1,0:T(1,128)}', space=vmem, size = 0x12000, scoped, tag = 'internal scratch']
  %s0 = inlined_call_operand.vmem [shape: f32[32,64], index: 0, kind: input, shape index: {}]
  %s1 = inlined_call_operand.vmem [shape: f32[32,128], index: 1, kind: input, shape index: {}]
  %s2 = inlined_call_operand.vmem [shape: f32[32,128], index: 2, kind: input, shape index: {}]
  %s3 = inlined_call_operand.vmem [shape: f32[128,64], index: 3, kind: input, shape index: {}]
  %s4 = inlined_call_operand.vmem [shape: f32[1,64], index: 4, kind: input, shape index: {}]
  %s5 = inlined_call_operand.vmem [shape: f32[64,128], index: 5, kind: input, shape index: {}]
  %s6 = inlined_call_operand.vmem [shape: f32[128,64], index: 6, kind: input, shape index: {}]
  %s7 = inlined_call_operand.vmem [shape: f32[1,64], index: 7, kind: input, shape index: {}]
  %s8 = inlined_call_operand.vmem [shape: f32[64,128], index: 8, kind: input, shape index: {}]
  %s9 = inlined_call_operand.vmem [shape: f32[128,32], index: 9, kind: input, shape index: {}]
  %s10 = inlined_call_operand.vmem [shape: f32[64,128], index: 10, kind: input, shape index: {}]
  %s11 = inlined_call_operand.vmem [shape: f32[32,128], index: 11, kind: input, shape index: {}]
  %s12 = inlined_call_operand.vmem [shape: f32[1,128], index: 12, kind: input, shape index: {}]
  %s13 = inlined_call_operand.hbm [shape: f32[32,128], index: 13, kind: output, shape index: {}]
  %s14 = sld [smem:[#allocation0]]
  $region85: #{tpu_custom_call.1} parent=0
    _
  %s16 = ssub.s32 1, %s14
  %s17 = scalar_select 0, %s16, %s14
  $region1: #{tpu_custom_call.1} parent=0
    #allocation2 [shape = 'u8[8192]{0}', space=vmem, size = 0x2000, scoped, tag = 'output window, operand 0']
    #allocation3 [shape = 's32[2]{0}', space=sflag, size = 0x8, scoped, tag = 'scoped memory for tpu_custom_call.1']
    %18 = vsyncpa [#allocation3], 0
    %s19 = scalar_lea.sflag [#allocation3], 1
    %20 = vsyncpa %s19, 0
    loop: start=0, step=1, limit=6
    $region2: #{tpu_custom_call.1} parent=1 // loop_pre_header
      _
    $region3: #{tpu_custom_call.1} parent=1 // loop_header
      %s22 = sphi 0, %s26
      %p23 = scmp.ge.s32.totalorder %s22, 6
      %s32 = sphi 0, %s34
      %s35 = sphi 0, %s32
      %s36 = sphi 0, %s35
      %s52 = sphi 0, %s36
      %s58 = sphi 0, %s60
      %s61 = sphi 0, %s58
      %s62 = sphi 0, %s61
      %s78 = sphi 0, %s62
      %s84 = sphi 0, %s86
      %s87 = sphi 0, %s84
      %s88 = sphi 0, %s87
      %s104 = sphi 0, %s88
      %s108 = sphi 0, %s108
      %s110 = sphi 0, %s108
      %s111 = sphi 0, %s110
      %s125 = sphi 0, %s111
      %s129 = sphi 0, %s129
      %s131 = sphi 0, %s129
      %s132 = sphi 0, %s131
      %s146 = sphi 0, %s132
      %s150 = sphi 0, %s150
      %s152 = sphi 0, %s150
      %s153 = sphi 0, %s152
      %s167 = sphi 0, %s153
      %s171 = sphi 0, %s171
      %s173 = sphi 0, %s171
      %s174 = sphi 0, %s173
      %s188 = sphi 0, %s174
      %s192 = sphi 0, %s192
      %s194 = sphi 0, %s192
      %s195 = sphi 0, %s194
      %s209 = sphi 0, %s195
      %s213 = sphi 0, %s213
      %s215 = sphi 0, %s213
      %s216 = sphi 0, %s215
      %s230 = sphi 0, %s216
      %s234 = sphi 0, %s234
      %s236 = sphi 0, %s234
      %s237 = sphi 0, %s236
      %s251 = sphi 0, %s237
      %s255 = sphi 0, %s255
      %s257 = sphi 0, %s255
      %s258 = sphi 0, %s257
      %s272 = sphi 0, %s258
      %s276 = sphi 0, %s276
      %s278 = sphi 0, %s276
      %s279 = sphi 0, %s278
      %s293 = sphi 0, %s279
      %s297 = sphi 0, %s297
      %s299 = sphi 0, %s297
      %s300 = sphi 0, %s299
      %s314 = sphi 0, %s300
      %s320 = sphi 0, %s322
      %s323 = sphi 0, %s320
      %s324 = sphi 0, %s323
      %s340 = sphi 0, %s324
    $region4: #{tpu_custom_call.1} parent=1 // loop_header_branch
      %25 = sbr.rel (%p23) target = $region8
    $region5: #{tpu_custom_call.1} parent=1 // loop_body
      %s27 = ssub.s32 %s22, 1
      %s28 = ssub.s32 %s22, 2
      %s29 = sadd.s32 %s22, 1
      %s30 = ssub.s32 %s22, %s29
      %p31 = scmp.eq.s32.totalorder %s30, 0
      %s33 = sadd.s32 %s32, 1
      %s34 = scalar_select %p31, %s32, %s33
      %p37 = pneg %p31
      %p38 = scmp.eq.s32.totalorder %s22, 3
      %p39 = por %p37, %p38
      %p40 = scmp.ne.s32.totalorder %s32, %s35
      %p41 = scmp.eq.s32.totalorder %s22, 0
      %p42 = por %p40, %p41
      %p43 = scmp.ne.s32.totalorder %s32, %s35
      %p44 = scmp.eq.s32.totalorder %s27, 3
      %p45 = por %p43, %p44
      %p46 = scmp.ne.s32.totalorder %s35, %s36
      %p47 = scmp.eq.s32.totalorder %s27, 0
      %p48 = por %p46, %p47
      %p49 = scmp.ne.s32.totalorder %s35, %s36
      %p50 = scmp.eq.s32.totalorder %s28, 3
      %p51 = por %p49, %p50
      %p53 = scmp.ne.s32.totalorder %s36, %s52
      %p54 = scmp.eq.s32.totalorder %s28, 0
      %p55 = por %p53, %p54
      %s56 = ssub.s32 %s22, %s29
      %p57 = scmp.eq.s32.totalorder %s56, 0
      %s59 = sadd.s32 %s58, 1
      %s60 = scalar_select %p57, %s58, %s59
      %p63 = pneg %p57
      %p64 = scmp.eq.s32.totalorder %s22, 3
      %p65 = por %p63, %p64
      %p66 = scmp.ne.s32.totalorder %s58, %s61
      %p67 = scmp.eq.s32.totalorder %s22, 0
      %p68 = por %p66, %p67
      %p69 = scmp.ne.s32.totalorder %s58, %s61
      %p70 = scmp.eq.s32.totalorder %s27, 3
      %p71 = por %p69, %p70
      %p72 = scmp.ne.s32.totalorder %s61, %s62
      %p73 = scmp.eq.s32.totalorder %s27, 0
      %p74 = por %p72, %p73
      %p75 = scmp.ne.s32.totalorder %s61, %s62
      %p76 = scmp.eq.s32.totalorder %s28, 3
      %p77 = por %p75, %p76
      %p79 = scmp.ne.s32.totalorder %s62, %s78
      %p80 = scmp.eq.s32.totalorder %s28, 0
      %p81 = por %p79, %p80
      %s82 = ssub.s32 %s22, %s29
      %p83 = scmp.eq.s32.totalorder %s82, 0
      %s85 = sadd.s32 %s84, 1
      %s86 = scalar_select %p83, %s84, %s85
      %p89 = pneg %p83
      %p90 = scmp.eq.s32.totalorder %s22, 3
      %p91 = por %p89, %p90
      %p92 = scmp.ne.s32.totalorder %s84, %s87
      %p93 = scmp.eq.s32.totalorder %s22, 0
      %p94 = por %p92, %p93
      %p95 = scmp.ne.s32.totalorder %s84, %s87
      %p96 = scmp.eq.s32.totalorder %s27, 3
      %p97 = por %p95, %p96
      %p98 = scmp.ne.s32.totalorder %s87, %s88
      %p99 = scmp.eq.s32.totalorder %s27, 0
      %p100 = por %p98, %p99
      %p101 = scmp.ne.s32.totalorder %s87, %s88
      %p102 = scmp.eq.s32.totalorder %s28, 3
      %p103 = por %p101, %p102
      %p105 = scmp.ne.s32.totalorder %s88, %s104
      %p106 = scmp.eq.s32.totalorder %s28, 0
      %p107 = por %p105, %p106
      %s109 = sadd.s32 %s108, 1
      %p112 = scmp.eq.s32.totalorder %s22, 3
      %p113 = scmp.ne.s32.totalorder %s108, %s110
      %p114 = scmp.eq.s32.totalorder %s22, 0
      %p115 = por %p113, %p114
      %p116 = scmp.ne.s32.totalorder %s108, %s110
      %p117 = scmp.eq.s32.totalorder %s27, 3
      %p118 = por %p116, %p117
      %p119 = scmp.ne.s32.totalorder %s110, %s111
      %p120 = scmp.eq.s32.totalorder %s27, 0
      %p121 = por %p119, %p120
      %p122 = scmp.ne.s32.totalorder %s110, %s111
      %p123 = scmp.eq.s32.totalorder %s28, 3
      %p124 = por %p122, %p123
      %p126 = scmp.ne.s32.totalorder %s111, %s125
      %p127 = scmp.eq.s32.totalorder %s28, 0
      %p128 = por %p126, %p127
      %s130 = sadd.s32 %s129, 1
      %p133 = scmp.eq.s32.totalorder %s22, 3
      %p134 = scmp.ne.s32.totalorder %s129, %s131
      %p135 = scmp.eq.s32.totalorder %s22, 0
      %p136 = por %p134, %p135
      %p137 = scmp.ne.s32.totalorder %s129, %s131
      %p138 = scmp.eq.s32.totalorder %s27, 3
      %p139 = por %p137, %p138
      %p140 = scmp.ne.s32.totalorder %s131, %s132
      %p141 = scmp.eq.s32.totalorder %s27, 0
      %p142 = por %p140, %p141
      %p143 = scmp.ne.s32.totalorder %s131, %s132
      %p144 = scmp.eq.s32.totalorder %s28, 3
      %p145 = por %p143, %p144
      %p147 = scmp.ne.s32.totalorder %s132, %s146
      %p148 = scmp.eq.s32.totalorder %s28, 0
      %p149 = por %p147, %p148
      %s151 = sadd.s32 %s150, 1
      %p154 = scmp.eq.s32.totalorder %s22, 3
      %p155 = scmp.ne.s32.totalorder %s150, %s152
      %p156 = scmp.eq.s32.totalorder %s22, 0
      %p157 = por %p155, %p156
      %p158 = scmp.ne.s32.totalorder %s150, %s152
      %p159 = scmp.eq.s32.totalorder %s27, 3
      %p160 = por %p158, %p159
      %p161 = scmp.ne.s32.totalorder %s152, %s153
      %p162 = scmp.eq.s32.totalorder %s27, 0
      %p163 = por %p161, %p162
      %p164 = scmp.ne.s32.totalorder %s152, %s153
      %p165 = scmp.eq.s32.totalorder %s28, 3
      %p166 = por %p164, %p165
      %p168 = scmp.ne.s32.totalorder %s153, %s167
      %p169 = scmp.eq.s32.totalorder %s28, 0
      %p170 = por %p168, %p169
      %s172 = sadd.s32 %s171, 1
      %p175 = scmp.eq.s32.totalorder %s22, 3
      %p176 = scmp.ne.s32.totalorder %s171, %s173
      %p177 = scmp.eq.s32.totalorder %s22, 0
      %p178 = por %p176, %p177
      %p179 = scmp.ne.s32.totalorder %s171, %s173
      %p180 = scmp.eq.s32.totalorder %s27, 3
      %p181 = por %p179, %p180
      %p182 = scmp.ne.s32.totalorder %s173, %s174
      %p183 = scmp.eq.s32.totalorder %s27, 0
      %p184 = por %p182, %p183
      %p185 = scmp.ne.s32.totalorder %s173, %s174
      %p186 = scmp.eq.s32.totalorder %s28, 3
      %p187 = por %p185, %p186
      %p189 = scmp.ne.s32.totalorder %s174, %s188
      %p190 = scmp.eq.s32.totalorder %s28, 0
      %p191 = por %p189, %p190
      %s193 = sadd.s32 %s192, 1
      %p196 = scmp.eq.s32.totalorder %s22, 3
      %p197 = scmp.ne.s32.totalorder %s192, %s194
      %p198 = scmp.eq.s32.totalorder %s22, 0
      %p199 = por %p197, %p198
      %p200 = scmp.ne.s32.totalorder %s192, %s194
      %p201 = scmp.eq.s32.totalorder %s27, 3
      %p202 = por %p200, %p201
      %p203 = scmp.ne.s32.totalorder %s194, %s195
      %p204 = scmp.eq.s32.totalorder %s27, 0
      %p205 = por %p203, %p204
      %p206 = scmp.ne.s32.totalorder %s194, %s195
      %p207 = scmp.eq.s32.totalorder %s28, 3
      %p208 = por %p206, %p207
      %p210 = scmp.ne.s32.totalorder %s195, %s209
      %p211 = scmp.eq.s32.totalorder %s28, 0
      %p212 = por %p210, %p211
      %s214 = sadd.s32 %s213, 1
      %p217 = scmp.eq.s32.totalorder %s22, 3
      %p218 = scmp.ne.s32.totalorder %s213, %s215
      %p219 = scmp.eq.s32.totalorder %s22, 0
      %p220 = por %p218, %p219
      %p221 = scmp.ne.s32.totalorder %s213, %s215
      %p222 = scmp.eq.s32.totalorder %s27, 3
      %p223 = por %p221, %p222
      %p224 = scmp.ne.s32.totalorder %s215, %s216
      %p225 = scmp.eq.s32.totalorder %s27, 0
      %p226 = por %p224, %p225
      %p227 = scmp.ne.s32.totalorder %s215, %s216
      %p228 = scmp.eq.s32.totalorder %s28, 3
      %p229 = por %p227, %p228
      %p231 = scmp.ne.s32.totalorder %s216, %s230
      %p232 = scmp.eq.s32.totalorder %s28, 0
      %p233 = por %p231, %p232
      %s235 = sadd.s32 %s234, 1
      %p238 = scmp.eq.s32.totalorder %s22, 3
      %p239 = scmp.ne.s32.totalorder %s234, %s236
      %p240 = scmp.eq.s32.totalorder %s22, 0
      %p241 = por %p239, %p240
      %p242 = scmp.ne.s32.totalorder %s234, %s236
      %p243 = scmp.eq.s32.totalorder %s27, 3
      %p244 = por %p242, %p243
      %p245 = scmp.ne.s32.totalorder %s236, %s237
      %p246 = scmp.eq.s32.totalorder %s27, 0
      %p247 = por %p245, %p246
      %p248 = scmp.ne.s32.totalorder %s236, %s237
      %p249 = scmp.eq.s32.totalorder %s28, 3
      %p250 = por %p248, %p249
      %p252 = scmp.ne.s32.totalorder %s237, %s251
      %p253 = scmp.eq.s32.totalorder %s28, 0
      %p254 = por %p252, %p253
      %s256 = sadd.s32 %s255, 1
      %p259 = scmp.eq.s32.totalorder %s22, 3
      %p260 = scmp.ne.s32.totalorder %s255, %s257
      %p261 = scmp.eq.s32.totalorder %s22, 0
      %p262 = por %p260, %p261
      %p263 = scmp.ne.s32.totalorder %s255, %s257
      %p264 = scmp.eq.s32.totalorder %s27, 3
      %p265 = por %p263, %p264
      %p266 = scmp.ne.s32.totalorder %s257, %s258
      %p267 = scmp.eq.s32.totalorder %s27, 0
      %p268 = por %p266, %p267
      %p269 = scmp.ne.s32.totalorder %s257, %s258
      %p270 = scmp.eq.s32.totalorder %s28, 3
      %p271 = por %p269, %p270
      %p273 = scmp.ne.s32.totalorder %s258, %s272
      %p274 = scmp.eq.s32.totalorder %s28, 0
      %p275 = por %p273, %p274
      %s277 = sadd.s32 %s276, 1
      %p280 = scmp.eq.s32.totalorder %s22, 3
      %p281 = scmp.ne.s32.totalorder %s276, %s278
      %p282 = scmp.eq.s32.totalorder %s22, 0
      %p283 = por %p281, %p282
      %p284 = scmp.ne.s32.totalorder %s276, %s278
      %p285 = scmp.eq.s32.totalorder %s27, 3
      %p286 = por %p284, %p285
      %p287 = scmp.ne.s32.totalorder %s278, %s279
      %p288 = scmp.eq.s32.totalorder %s27, 0
      %p289 = por %p287, %p288
      %p290 = scmp.ne.s32.totalorder %s278, %s279
      %p291 = scmp.eq.s32.totalorder %s28, 3
      %p292 = por %p290, %p291
      %p294 = scmp.ne.s32.totalorder %s279, %s293
      %p295 = scmp.eq.s32.totalorder %s28, 0
      %p296 = por %p294, %p295
      %s298 = sadd.s32 %s297, 1
      %p301 = scmp.eq.s32.totalorder %s22, 3
      %p302 = scmp.ne.s32.totalorder %s297, %s299
      %p303 = scmp.eq.s32.totalorder %s22, 0
      %p304 = por %p302, %p303
      %p305 = scmp.ne.s32.totalorder %s297, %s299
      %p306 = scmp.eq.s32.totalorder %s27, 3
      %p307 = por %p305, %p306
      %p308 = scmp.ne.s32.totalorder %s299, %s300
      %p309 = scmp.eq.s32.totalorder %s27, 0
      %p310 = por %p308, %p309
      %p311 = scmp.ne.s32.totalorder %s299, %s300
      %p312 = scmp.eq.s32.totalorder %s28, 3
      %p313 = por %p311, %p312
      %p315 = scmp.ne.s32.totalorder %s300, %s314
      %p316 = scmp.eq.s32.totalorder %s28, 0
      %p317 = por %p315, %p316
      %s318 = ssub.s32 %s22, %s29
      %p319 = scmp.eq.s32.totalorder %s318, 0
      %s321 = sadd.s32 %s320, 1
      %s322 = scalar_select %p319, %s320, %s321
      %p325 = pneg %p319
      %p326 = scmp.eq.s32.totalorder %s22, 3
      %p327 = por %p325, %p326
      %p328 = scmp.ne.s32.totalorder %s320, %s323
      %p329 = scmp.eq.s32.totalorder %s22, 0
      %p330 = por %p328, %p329
      %p331 = scmp.ne.s32.totalorder %s320, %s323
      %p332 = scmp.eq.s32.totalorder %s27, 3
      %p333 = por %p331, %p332
      %p334 = scmp.ne.s32.totalorder %s323, %s324
      %p335 = scmp.eq.s32.totalorder %s27, 0
      %p336 = por %p334, %p335
      %p337 = scmp.ne.s32.totalorder %s323, %s324
      %p338 = scmp.eq.s32.totalorder %s28, 3
      %p339 = por %p337, %p338
      %p341 = scmp.ne.s32.totalorder %s324, %s340
      %p342 = scmp.eq.s32.totalorder %s28, 0
      %p343 = por %p341, %p342
      %p344 = scmp.le.s32.totalorder 1, %s22
      %p345 = scmp.lt.s32.totalorder %s22, 5
      %p346 = pnand %p344, %p345
      %p347 = pneg %p346
      // Predicated region
      $region9: #{tpu_custom_call.1} parent=5 // pred_check
        _
      $region10: #{tpu_custom_call.1} parent=5 // pred_check_branch
        %349 = sbr.rel (%p346) target = $region12
      $region11: #{tpu_custom_call.1} parent=5 // pred_region
        %s350 = ssub.s32 %s22, 1
        // Predicated region
        $region13: #{tpu_custom_call.1} parent=11 // pred_check
          %p351 = pneg %p121
        $region14: #{tpu_custom_call.1} parent=11 // pred_check_branch
          %353 = sbr.rel (%p351) target = $region16
        $region15: #{tpu_custom_call.1} parent=11 // pred_region
          _
        $region16: #{tpu_custom_call.1} parent=11 // pred_fallthru
          _
        // Predicated region
        $region17: #{tpu_custom_call.1} parent=11 // pred_check
          %p354 = pneg %p142
        $region18: #{tpu_custom_call.1} parent=11 // pred_check_branch
          %356 = sbr.rel (%p354) target = $region20
        $region19: #{tpu_custom_call.1} parent=11 // pred_region
          _
        $region20: #{tpu_custom_call.1} parent=11 // pred_fallthru
          _
        // Predicated region
        $region21: #{tpu_custom_call.1} parent=11 // pred_check
          %p357 = pneg %p163
        $region22: #{tpu_custom_call.1} parent=11 // pred_check_branch
          %359 = sbr.rel (%p357) target = $region24
        $region23: #{tpu_custom_call.1} parent=11 // pred_region
          _
        $region24: #{tpu_custom_call.1} parent=11 // pred_fallthru
          _
        // Predicated region
        $region25: #{tpu_custom_call.1} parent=11 // pred_check
          %p360 = pneg %p184
        $region26: #{tpu_custom_call.1} parent=11 // pred_check_branch
          %362 = sbr.rel (%p360) target = $region28
        $region27: #{tpu_custom_call.1} parent=11 // pred_region
          _
        $region28: #{tpu_custom_call.1} parent=11 // pred_fallthru
          _
        // Predicated region
        $region29: #{tpu_custom_call.1} parent=11 // pred_check
          %p363 = pneg %p205
        $region30: #{tpu_custom_call.1} parent=11 // pred_check_branch
          %365 = sbr.rel (%p363) target = $region32
        $region31: #{tpu_custom_call.1} parent=11 // pred_region
          _
        $region32: #{tpu_custom_call.1} parent=11 // pred_fallthru
          _
        // Predicated region
        $region33: #{tpu_custom_call.1} parent=11 // pred_check
          %p366 = pneg %p226
        $region34: #{tpu_custom_call.1} parent=11 // pred_check_branch
          %368 = sbr.rel (%p366) target = $region36
        $region35: #{tpu_custom_call.1} parent=11 // pred_region
          _
        $region36: #{tpu_custom_call.1} parent=11 // pred_fallthru
          _
        // Predicated region
        $region37: #{tpu_custom_call.1} parent=11 // pred_check
          %p369 = pneg %p247
        $region38: #{tpu_custom_call.1} parent=11 // pred_check_branch
          %371 = sbr.rel (%p369) target = $region40
        $region39: #{tpu_custom_call.1} parent=11 // pred_region
          _
        $region40: #{tpu_custom_call.1} parent=11 // pred_fallthru
          _
        // Predicated region
        $region41: #{tpu_custom_call.1} parent=11 // pred_check
          %p372 = pneg %p268
        $region42: #{tpu_custom_call.1} parent=11 // pred_check_branch
          %374 = sbr.rel (%p372) target = $region44
        $region43: #{tpu_custom_call.1} parent=11 // pred_region
          _
        $region44: #{tpu_custom_call.1} parent=11 // pred_fallthru
          _
        // Predicated region
        $region45: #{tpu_custom_call.1} parent=11 // pred_check
          %p375 = pneg %p289
        $region46: #{tpu_custom_call.1} parent=11 // pred_check_branch
          %377 = sbr.rel (%p375) target = $region48
        $region47: #{tpu_custom_call.1} parent=11 // pred_region
          _
        $region48: #{tpu_custom_call.1} parent=11 // pred_fallthru
          _
        // Predicated region
        $region49: #{tpu_custom_call.1} parent=11 // pred_check
          %p378 = pneg %p310
        $region50: #{tpu_custom_call.1} parent=11 // pred_check_branch
          %380 = sbr.rel (%p378) target = $region52
        $region51: #{tpu_custom_call.1} parent=11 // pred_region
          _
        $region52: #{tpu_custom_call.1} parent=11 // pred_fallthru
          _
      $region12: #{tpu_custom_call.1} parent=5 // pred_fallthru
        _
      %p381 = scmp.lt.s32.totalorder %s22, 4
      // Predicated region
      $region53: #{tpu_custom_call.1} parent=5 // pred_check
        %p382 = pneg %p381
      $region54: #{tpu_custom_call.1} parent=5 // pred_check_branch
        %384 = sbr.rel (%p382) target = $region56
      $region55: #{tpu_custom_call.1} parent=5 // pred_region
        // Predicated region
        $region57: #{tpu_custom_call.1} parent=55 // pred_check
          %p385 = pneg %p42
        $region58: #{tpu_custom_call.1} parent=55 // pred_check_branch
          %387 = sbr.rel (%p385) target = $region60
        $region59: #{tpu_custom_call.1} parent=55 // pred_region
          %p388 = scmp.lt.s32.totalorder %s22, 3
          %s389 = scalar_select %p388, %s22, 3
          %s390 = smul.addr %s389, 8
          %s391 = scalar_lea.vmem %s0, %s390
        $region60: #{tpu_custom_call.1} parent=55 // pred_fallthru
          _
        // Predicated region
        $region61: #{tpu_custom_call.1} parent=55 // pred_check
          %p392 = pneg %p68
        $region62: #{tpu_custom_call.1} parent=55 // pred_check_branch
          %394 = sbr.rel (%p392) target = $region64
        $region63: #{tpu_custom_call.1} parent=55 // pred_region
          %p395 = scmp.lt.s32.totalorder %s22, 3
          %s396 = scalar_select %p395, %s22, 3
          %s397 = smul.addr %s396, 8
          %s398 = scalar_lea.vmem %s1, %s397
        $region64: #{tpu_custom_call.1} parent=55 // pred_fallthru
          _
        // Predicated region
        $region65: #{tpu_custom_call.1} parent=55 // pred_check
          %p399 = pneg %p94
        $region66: #{tpu_custom_call.1} parent=55 // pred_check_branch
          %401 = sbr.rel (%p399) target = $region68
        $region67: #{tpu_custom_call.1} parent=55 // pred_region
          %p402 = scmp.lt.s32.totalorder %s22, 3
          %s403 = scalar_select %p402, %s22, 3
          %s404 = smul.addr %s403, 8
          %s405 = scalar_lea.vmem %s2, %s404
        $region68: #{tpu_custom_call.1} parent=55 // pred_fallthru
          _
      $region56: #{tpu_custom_call.1} parent=5 // pred_fallthru
        _
      %p406 = scmp.le.s32.totalorder 1, %s22
      %p407 = scmp.lt.s32.totalorder %s22, 5
      %p408 = pnand %p406, %p407
      %p409 = pneg %p408
      // Predicated region
      $region69: #{tpu_custom_call.1} parent=5 // pred_check
        _
      $region70: #{tpu_custom_call.1} parent=5 // pred_check_branch
        %411 = sbr.rel (%p408) target = $region72
      $region71: #{tpu_custom_call.1} parent=5 // pred_region
        %s412 = ssub.s32 %s22, 1
        %p413 = scmp.lt.s32.totalorder %s27, 3
        %s414 = scalar_select %p413, %s27, 3
        %s415 = smul.addr %s414, 8
        %s416 = scalar_lea.vmem %s0, %s415
        %p417 = pneg %p48
        %p418 = pneg %p45
        %p419 = scmp.lt.s32.totalorder %s27, 3
        %s420 = scalar_select %p419, %s27, 3
        %s421 = smul.addr %s420, 8
        %s422 = scalar_lea.vmem %s1, %s421
        %p423 = pneg %p74
        %p424 = pneg %p71
        %p425 = scmp.lt.s32.totalorder %s27, 3
        %s426 = scalar_select %p425, %s27, 3
        %s427 = smul.addr %s426, 8
        %s428 = scalar_lea.vmem %s2, %s427
        %p429 = pneg %p100
        %p430 = pneg %p97
        %p431 = pneg %p121
        %p432 = pneg %p118
        %p433 = pneg %p142
        %p434 = pneg %p139
        %p435 = pneg %p163
        %p436 = pneg %p160
        %p437 = pneg %p184
        %p438 = pneg %p181
        %p439 = pneg %p205
        %p440 = pneg %p202
        %p441 = pneg %p226
        %p442 = pneg %p223
        %p443 = pneg %p247
        %p444 = pneg %p244
        %p445 = pneg %p268
        %p446 = pneg %p265
        %p447 = pneg %p289
        %p448 = pneg %p286
        %p449 = pneg %p310
        %p450 = pneg %p307
        %p451 = pneg %p336
        %p452 = pneg %p333
        %s453 = sand.u32 %s323, 1
        %s454 = scalar_lea.sflag [#allocation3], %s453
        %s455 = sand.u32 %s323, 1
        %s456 = smul.addr %s455, 8
        %s457 = scalar_lea.vmem [#allocation2], %s456
        %p458 = scmp.lt.s32.totalorder %s27, 3
        %s459 = scalar_select %p458, %s27, 3
        %s460 = smul.addr %s459, 8
        %s461 = scalar_lea.vmem %s0, %s460
        %p462 = scmp.lt.s32.totalorder %s27, 3
        %s463 = scalar_select %p462, %s27, 3
        %s464 = smul.addr %s463, 8
        %s465 = scalar_lea.vmem %s1, %s464
        %p466 = scmp.lt.s32.totalorder %s27, 3
        %s467 = scalar_select %p466, %s27, 3
        %s468 = smul.addr %s467, 8
        %s469 = scalar_lea.vmem %s2, %s468
        %v470 = vld [vmem:[%s9] sm:$0xff]
        %v471 = vld [vmem:[%s9 + $0x8] sm:$0xff]
        %v472 = vld [vmem:[%s9 + $0x10] sm:$0xff]
        %v473 = vld [vmem:[%s9 + $0x18] sm:$0xff]
        %v474 = vld [vmem:[%s9 + $0x20] sm:$0xff]
        %v475 = vld [vmem:[%s9 + $0x28] sm:$0xff]
        %v476 = vld [vmem:[%s9 + $0x30] sm:$0xff]
        %v477 = vld [vmem:[%s9 + $0x38] sm:$0xff]
        %v478 = vld [vmem:[%s9 + $0x40] sm:$0xff]
        %v479 = vld [vmem:[%s9 + $0x48] sm:$0xff]
        %v480 = vld [vmem:[%s9 + $0x50] sm:$0xff]
        %v481 = vld [vmem:[%s9 + $0x58] sm:$0xff]
        %v482 = vld [vmem:[%s9 + $0x60] sm:$0xff]
        %v483 = vld [vmem:[%s9 + $0x68] sm:$0xff]
        %v484 = vld [vmem:[%s9 + $0x70] sm:$0xff]
        %v485 = vld [vmem:[%s9 + $0x78] sm:$0xff]
        %v486 = vld [vmem:[%s465] sm:$0xff]
        %v487 = vld [vmem:[%s3] sm:$0xff]
        %v488 = vld [vmem:[%s3 + $0x8] sm:$0xff]
        %v489 = vld [vmem:[%s3 + $0x10] sm:$0xff]
        %v490 = vld [vmem:[%s3 + $0x18] sm:$0xff]
        %v491 = vld [vmem:[%s3 + $0x20] sm:$0xff]
        %v492 = vld [vmem:[%s3 + $0x28] sm:$0xff]
        %v493 = vld [vmem:[%s3 + $0x30] sm:$0xff]
        %v494 = vld [vmem:[%s3 + $0x38] sm:$0xff]
        %v495 = vld [vmem:[%s3 + $0x40] sm:$0xff]
        %v496 = vld [vmem:[%s3 + $0x48] sm:$0xff]
        %v497 = vld [vmem:[%s3 + $0x50] sm:$0xff]
        %v498 = vld [vmem:[%s3 + $0x58] sm:$0xff]
        %v499 = vld [vmem:[%s3 + $0x60] sm:$0xff]
        %v500 = vld [vmem:[%s3 + $0x68] sm:$0xff]
        %v501 = vld [vmem:[%s3 + $0x70] sm:$0xff]
        %v502 = vld [vmem:[%s3 + $0x78] sm:$0xff]
        %v503 = vld [vmem:[%s4] sm:$0x1]
        %v505 = vlaneseq
        %v506 = vshrl.u32 %v505, 7
        %v507 = vsub.s32 0, %v506
        %v508 = vrot.slane %v503, %v507
        %510 = vmatprep.subr.mxu0 0.0
        %511 = vmatpush1.msra.mxu0 %v487
        %512 = vmatprep.subr.mxu0 0.0
        %513 = vmatpush1.msra.mxu0 %v488
        %514 = vmatprep.subr.mxu0 0.0
        %515 = vmatpush1.msra.mxu0 %v489
        %516 = vmatprep.subr.mxu0 0.0
        %517 = vmatpush1.msra.mxu0 %v490
        %518 = vmatprep.subr.mxu0 0.0
        %519 = vmatpush1.msra.mxu0 %v491
        %520 = vmatprep.subr.mxu0 0.0
        %521 = vmatpush1.msra.mxu0 %v492
        %522 = vmatprep.subr.mxu0 0.0
        %523 = vmatpush1.msra.mxu0 %v493
        %524 = vmatprep.subr.mxu0 0.0
        %525 = vmatpush1.msra.mxu0 %v494
        %526 = vmatprep.subr.mxu0 0.0
        %527 = vmatpush1.msra.mxu0 %v495
        %528 = vmatprep.subr.mxu0 0.0
        %529 = vmatpush1.msra.mxu0 %v496
        %530 = vmatprep.subr.mxu0 0.0
        %531 = vmatpush1.msra.mxu0 %v497
        %532 = vmatprep.subr.mxu0 0.0
        %533 = vmatpush1.msra.mxu0 %v498
        %534 = vmatprep.subr.mxu0 0.0
        %535 = vmatpush1.msra.mxu0 %v499
        %536 = vmatprep.subr.mxu0 0.0
        %537 = vmatpush1.msra.mxu0 %v500
        %538 = vmatprep.subr.mxu0 0.0
        %539 = vmatpush1.msra.mxu0 %v501
        %540 = vmatprep.subr.mxu0 0.0
        %541 = vmatpush1.msra.mxu0 %v502
        %542 = vmatprep.subr.mxu0 0.0
        %543 = vmatpush1.msra.mxu0 0.0
        %544 = vmatprep.subr.mxu0 0.0
        %545 = vmatpush1.msra.mxu0 0.0
        %546 = vmatprep.subr.mxu0 0.0
        %547 = vmatpush1.msra.mxu0 0.0
        %548 = vmatprep.subr.mxu0 0.0
        %549 = vmatpush1.msra.mxu0 0.0
        %550 = vmatprep.subr.mxu0 0.0
        %551 = vmatpush1.msra.mxu0 0.0
        %552 = vmatprep.subr.mxu0 0.0
        %553 = vmatpush1.msra.mxu0 0.0
        %554 = vmatprep.subr.mxu0 0.0
        %555 = vmatpush1.msra.mxu0 0.0
        %556 = vmatprep.subr.mxu0 0.0
        %557 = vmatpush1.msra.mxu0 0.0
        %558 = vmatprep.subr.mxu0 0.0
        %559 = vmatpush1.msra.mxu0 0.0
        %560 = vmatprep.subr.mxu0 0.0
        %561 = vmatpush1.msra.mxu0 0.0
        %562 = vmatprep.subr.mxu0 0.0
        %563 = vmatpush1.msra.mxu0 0.0
        %564 = vmatprep.subr.mxu0 0.0
        %565 = vmatpush1.msra.mxu0 0.0
        %566 = vmatprep.subr.mxu0 0.0
        %567 = vmatpush1.msra.mxu0 0.0
        %568 = vmatprep.subr.mxu0 0.0
        %569 = vmatpush1.msra.mxu0 0.0
        %570 = vmatprep.subr.mxu0 0.0
        %571 = vmatpush1.msra.mxu0 0.0
        %572 = vmatprep.subr.mxu0 0.0
        %573 = vmatpush1.msra.mxu0 0.0
        %574 = vmatprep.mubr.f32.mxu0 0.0
        %575 = vmatmul.mubr.f32.gmra.mrb[0].mxu0 %v486
        %v576 = vpop.f32.mrb[0].mxu0
        %v577 = vadd.f32 %v508, %v576
        %v578 = vpop.f32.mrb[0].mxu0
        %579 = vdwg.mxu0
        %v580 = vmax.f32 %v577, 0.0
        %v581 = vld [vmem:[%s5] sm:$0xff]
        %v582 = vld [vmem:[%s5 + $0x8] sm:$0xff]
        %v583 = vld [vmem:[%s5 + $0x10] sm:$0xff]
        %v584 = vld [vmem:[%s5 + $0x18] sm:$0xff]
        %v585 = vld [vmem:[%s5 + $0x20] sm:$0xff]
        %v586 = vld [vmem:[%s5 + $0x28] sm:$0xff]
        %v587 = vld [vmem:[%s5 + $0x30] sm:$0xff]
        %v588 = vld [vmem:[%s5 + $0x38] sm:$0xff]
        %vm589 = vcmask 523264
        %v591 = vsel %vm589, %v580, 0
        %593 = vmatprep.subr.mxu0 0.0
        %594 = vmatpush1.msra.mxu0 %v581
        %595 = vmatprep.subr.mxu0 0.0
        %596 = vmatpush1.msra.mxu0 %v582
        %597 = vmatprep.subr.mxu0 0.0
        %598 = vmatpush1.msra.mxu0 %v583
        %599 = vmatprep.subr.mxu0 0.0
        %600 = vmatpush1.msra.mxu0 %v584
        %601 = vmatprep.subr.mxu0 0.0
        %602 = vmatpush1.msra.mxu0 %v585
        %603 = vmatprep.subr.mxu0 0.0
        %604 = vmatpush1.msra.mxu0 %v586
        %605 = vmatprep.subr.mxu0 0.0
        %606 = vmatpush1.msra.mxu0 %v587
        %607 = vmatprep.subr.mxu0 0.0
        %608 = vmatpush1.msra.mxu0 %v588
        %609 = vmatprep.subr.mxu0 0.0
        %610 = vmatpush1.msra.mxu0 0.0
        %611 = vmatprep.subr.mxu0 0.0
        %612 = vmatpush1.msra.mxu0 0.0
        %613 = vmatprep.subr.mxu0 0.0
        %614 = vmatpush1.msra.mxu0 0.0
        %615 = vmatprep.subr.mxu0 0.0
        %616 = vmatpush1.msra.mxu0 0.0
        %617 = vmatprep.subr.mxu0 0.0
        %618 = vmatpush1.msra.mxu0 0.0
        %619 = vmatprep.subr.mxu0 0.0
        %620 = vmatpush1.msra.mxu0 0.0
        %621 = vmatprep.subr.mxu0 0.0
        %622 = vmatpush1.msra.mxu0 0.0
        %623 = vmatprep.subr.mxu0 0.0
        %624 = vmatpush1.msra.mxu0 0.0
        %625 = vmatprep.subr.mxu0 0.0
        %626 = vmatpush1.msra.mxu0 0.0
        %627 = vmatprep.subr.mxu0 0.0
        %628 = vmatpush1.msra.mxu0 0.0
        %629 = vmatprep.subr.mxu0 0.0
        %630 = vmatpush1.msra.mxu0 0.0
        %631 = vmatprep.subr.mxu0 0.0
        %632 = vmatpush1.msra.mxu0 0.0
        %633 = vmatprep.subr.mxu0 0.0
        %634 = vmatpush1.msra.mxu0 0.0
        %635 = vmatprep.subr.mxu0 0.0
        %636 = vmatpush1.msra.mxu0 0.0
        %637 = vmatprep.subr.mxu0 0.0
        %638 = vmatpush1.msra.mxu0 0.0
        %639 = vmatprep.subr.mxu0 0.0
        %640 = vmatpush1.msra.mxu0 0.0
        %641 = vmatprep.subr.mxu0 0.0
        %642 = vmatpush1.msra.mxu0 0.0
        %643 = vmatprep.subr.mxu0 0.0
        %644 = vmatpush1.msra.mxu0 0.0
        %645 = vmatprep.subr.mxu0 0.0
        %646 = vmatpush1.msra.mxu0 0.0
        %647 = vmatprep.subr.mxu0 0.0
        %648 = vmatpush1.msra.mxu0 0.0
        %649 = vmatprep.subr.mxu0 0.0
        %650 = vmatpush1.msra.mxu0 0.0
        %651 = vmatprep.subr.mxu0 0.0
        %652 = vmatpush1.msra.mxu0 0.0
        %653 = vmatprep.subr.mxu0 0.0
        %654 = vmatpush1.msra.mxu0 0.0
        %655 = vmatprep.subr.mxu0 0.0
        %656 = vmatpush1.msra.mxu0 0.0
        %657 = vmatprep.mubr.f32.mxu0 0.0
        %658 = vmatmul.mubr.f32.gmra.mrb[0].mxu0 %v591
        %v659 = vpop.f32.mrb[0].mxu0
        %v660 = vadd.f32 0.0, %v659
        %v661 = vpop.f32.mrb[0].mxu0
        %662 = vdwg.mxu0
        %663 = vmax.xlane.f32.xlu0 %v660
        %v664 = vpop.xlane.xlu0 %663
        %v665 = vsub.f32 %v660, %v664
        %v666 = vmul.f32 %v665, 1.442695
        %v667 = vpow.pop %v666
        %668 = vadd.xlane.f32.xlu0 %v667
        %v669 = vpop.xlane.xlu0 %668
        %v670 = vrcp.pop %v669
        %v671 = vmul.f32 %v670, 32.0
        %v672 = vmul.f32 %v667, %v671
        %v673 = vmul.f32 %v486, %v672
        %674 = vmatprep.subr.mxu0 0.0
        %675 = vmatpush1.msra.mxu0 %v470
        %676 = vmatprep.subr.mxu0 0.0
        %677 = vmatpush1.msra.mxu0 %v471
        %678 = vmatprep.subr.mxu0 0.0
        %679 = vmatpush1.msra.mxu0 %v472
        %680 = vmatprep.subr.mxu0 0.0
        %681 = vmatpush1.msra.mxu0 %v473
        %682 = vmatprep.subr.mxu0 0.0
        %683 = vmatpush1.msra.mxu0 %v474
        %684 = vmatprep.subr.mxu0 0.0
        %685 = vmatpush1.msra.mxu0 %v475
        %686 = vmatprep.subr.mxu0 0.0
        %687 = vmatpush1.msra.mxu0 %v476
        %688 = vmatprep.subr.mxu0 0.0
        %689 = vmatpush1.msra.mxu0 %v477
        %690 = vmatprep.subr.mxu0 0.0
        %691 = vmatpush1.msra.mxu0 %v478
        %692 = vmatprep.subr.mxu0 0.0
        %693 = vmatpush1.msra.mxu0 %v479
        %694 = vmatprep.subr.mxu0 0.0
        %695 = vmatpush1.msra.mxu0 %v480
        %696 = vmatprep.subr.mxu0 0.0
        %697 = vmatpush1.msra.mxu0 %v481
        %698 = vmatprep.subr.mxu0 0.0
        %699 = vmatpush1.msra.mxu0 %v482
        %700 = vmatprep.subr.mxu0 0.0
        %701 = vmatpush1.msra.mxu0 %v483
        %702 = vmatprep.subr.mxu0 0.0
        %703 = vmatpush1.msra.mxu0 %v484
        %704 = vmatprep.subr.mxu0 0.0
        %705 = vmatpush1.msra.mxu0 %v485
        %706 = vmatprep.subr.mxu0 0.0
        %707 = vmatpush1.msra.mxu0 0.0
        %708 = vmatprep.subr.mxu0 0.0
        %709 = vmatpush1.msra.mxu0 0.0
        %710 = vmatprep.subr.mxu0 0.0
        %711 = vmatpush1.msra.mxu0 0.0
        %712 = vmatprep.subr.mxu0 0.0
        %713 = vmatpush1.msra.mxu0 0.0
        %714 = vmatprep.subr.mxu0 0.0
        %715 = vmatpush1.msra.mxu0 0.0
        %716 = vmatprep.subr.mxu0 0.0
        %717 = vmatpush1.msra.mxu0 0.0
        %718 = vmatprep.subr.mxu0 0.0
        %719 = vmatpush1.msra.mxu0 0.0
        %720 = vmatprep.subr.mxu0 0.0
        %721 = vmatpush1.msra.mxu0 0.0
        %722 = vmatprep.subr.mxu0 0.0
        %723 = vmatpush1.msra.mxu0 0.0
        %724 = vmatprep.subr.mxu0 0.0
        %725 = vmatpush1.msra.mxu0 0.0
        %726 = vmatprep.subr.mxu0 0.0
        %727 = vmatpush1.msra.mxu0 0.0
        %728 = vmatprep.subr.mxu0 0.0
        %729 = vmatpush1.msra.mxu0 0.0
        %730 = vmatprep.subr.mxu0 0.0
        %731 = vmatpush1.msra.mxu0 0.0
        %732 = vmatprep.subr.mxu0 0.0
        %733 = vmatpush1.msra.mxu0 0.0
        %734 = vmatprep.subr.mxu0 0.0
        %735 = vmatpush1.msra.mxu0 0.0
        %736 = vmatprep.subr.mxu0 0.0
        %737 = vmatpush1.msra.mxu0 0.0
        %738 = vmatprep.mubr.f32.mxu0 0.0
        %739 = vmatmul.mubr.f32.gmra.mrb[0].mxu0 %v673
        %v740 = vpop.f32.mrb[0].mxu0
        %v741 = vadd.f32 0.0, %v740
        %v742 = vpop.f32.mrb[0].mxu0
        %743 = vdwg.mxu0
        %v744 = vld [vmem:[%s469] sm:$0xff]
        %v745 = vld [vmem:[%s6] sm:$0xff]
        %v746 = vld [vmem:[%s6 + $0x8] sm:$0xff]
        %v747 = vld [vmem:[%s6 + $0x10] sm:$0xff]
        %v748 = vld [vmem:[%s6 + $0x18] sm:$0xff]
        %v749 = vld [vmem:[%s6 + $0x20] sm:$0xff]
        %v750 = vld [vmem:[%s6 + $0x28] sm:$0xff]
        %v751 = vld [vmem:[%s6 + $0x30] sm:$0xff]
        %v752 = vld [vmem:[%s6 + $0x38] sm:$0xff]
        %v753 = vld [vmem:[%s6 + $0x40] sm:$0xff]
        %v754 = vld [vmem:[%s6 + $0x48] sm:$0xff]
        %v755 = vld [vmem:[%s6 + $0x50] sm:$0xff]
        %v756 = vld [vmem:[%s6 + $0x58] sm:$0xff]
        %v757 = vld [vmem:[%s6 + $0x60] sm:$0xff]
        %v758 = vld [vmem:[%s6 + $0x68] sm:$0xff]
        %v759 = vld [vmem:[%s6 + $0x70] sm:$0xff]
        %v760 = vld [vmem:[%s6 + $0x78] sm:$0xff]
        %v761 = vld [vmem:[%s7] sm:$0x1]
        %v763 = vlaneseq
        %v764 = vshrl.u32 %v763, 7
        %v765 = vsub.s32 0, %v764
        %v766 = vrot.slane %v761, %v765
        %768 = vmatprep.subr.mxu0 0.0
        %769 = vmatpush1.msra.mxu0 %v745
        %770 = vmatprep.subr.mxu0 0.0
        %771 = vmatpush1.msra.mxu0 %v746
        %772 = vmatprep.subr.mxu0 0.0
        %773 = vmatpush1.msra.mxu0 %v747
        %774 = vmatprep.subr.mxu0 0.0
        %775 = vmatpush1.msra.mxu0 %v748
        %776 = vmatprep.subr.mxu0 0.0
        %777 = vmatpush1.msra.mxu0 %v749
        %778 = vmatprep.subr.mxu0 0.0
        %779 = vmatpush1.msra.mxu0 %v750
        %780 = vmatprep.subr.mxu0 0.0
        %781 = vmatpush1.msra.mxu0 %v751
        %782 = vmatprep.subr.mxu0 0.0
        %783 = vmatpush1.msra.mxu0 %v752
        %784 = vmatprep.subr.mxu0 0.0
        %785 = vmatpush1.msra.mxu0 %v753
        %786 = vmatprep.subr.mxu0 0.0
        %787 = vmatpush1.msra.mxu0 %v754
        %788 = vmatprep.subr.mxu0 0.0
        %789 = vmatpush1.msra.mxu0 %v755
        %790 = vmatprep.subr.mxu0 0.0
        %791 = vmatpush1.msra.mxu0 %v756
        %792 = vmatprep.subr.mxu0 0.0
        %793 = vmatpush1.msra.mxu0 %v757
        %794 = vmatprep.subr.mxu0 0.0
        %795 = vmatpush1.msra.mxu0 %v758
        %796 = vmatprep.subr.mxu0 0.0
        %797 = vmatpush1.msra.mxu0 %v759
        %798 = vmatprep.subr.mxu0 0.0
        %799 = vmatpush1.msra.mxu0 %v760
        %800 = vmatprep.subr.mxu0 0.0
        %801 = vmatpush1.msra.mxu0 0.0
        %802 = vmatprep.subr.mxu0 0.0
        %803 = vmatpush1.msra.mxu0 0.0
        %804 = vmatprep.subr.mxu0 0.0
        %805 = vmatpush1.msra.mxu0 0.0
        %806 = vmatprep.subr.mxu0 0.0
        %807 = vmatpush1.msra.mxu0 0.0
        %808 = vmatprep.subr.mxu0 0.0
        %809 = vmatpush1.msra.mxu0 0.0
        %810 = vmatprep.subr.mxu0 0.0
        %811 = vmatpush1.msra.mxu0 0.0
        %812 = vmatprep.subr.mxu0 0.0
        %813 = vmatpush1.msra.mxu0 0.0
        %814 = vmatprep.subr.mxu0 0.0
        %815 = vmatpush1.msra.mxu0 0.0
        %816 = vmatprep.subr.mxu0 0.0
        %817 = vmatpush1.msra.mxu0 0.0
        %818 = vmatprep.subr.mxu0 0.0
        %819 = vmatpush1.msra.mxu0 0.0
        %820 = vmatprep.subr.mxu0 0.0
        %821 = vmatpush1.msra.mxu0 0.0
        %822 = vmatprep.subr.mxu0 0.0
        %823 = vmatpush1.msra.mxu0 0.0
        %824 = vmatprep.subr.mxu0 0.0
        %825 = vmatpush1.msra.mxu0 0.0
        %826 = vmatprep.subr.mxu0 0.0
        %827 = vmatpush1.msra.mxu0 0.0
        %828 = vmatprep.subr.mxu0 0.0
        %829 = vmatpush1.msra.mxu0 0.0
        %830 = vmatprep.subr.mxu0 0.0
        %831 = vmatpush1.msra.mxu0 0.0
        %832 = vmatprep.mubr.f32.mxu0 0.0
        %833 = vmatmul.mubr.f32.gmra.mrb[0].mxu0 %v744
        %v834 = vpop.f32.mrb[0].mxu0
        %v835 = vadd.f32 %v766, %v834
        %v836 = vpop.f32.mrb[0].mxu0
        %837 = vdwg.mxu0
        %v838 = vmax.f32 %v835, 0.0
        %v839 = vld [vmem:[%s8] sm:$0xff]
        %v840 = vld [vmem:[%s8 + $0x8] sm:$0xff]
        %v841 = vld [vmem:[%s8 + $0x10] sm:$0xff]
        %v842 = vld [vmem:[%s8 + $0x18] sm:$0xff]
        %v843 = vld [vmem:[%s8 + $0x20] sm:$0xff]
        %v844 = vld [vmem:[%s8 + $0x28] sm:$0xff]
        %v845 = vld [vmem:[%s8 + $0x30] sm:$0xff]
        %v846 = vld [vmem:[%s8 + $0x38] sm:$0xff]
        %v848 = vsel %vm589, %v838, 0
        %850 = vmatprep.subr.mxu0 0.0
        %851 = vmatpush1.msra.mxu0 %v839
        %852 = vmatprep.subr.mxu0 0.0
        %853 = vmatpush1.msra.mxu0 %v840
        %854 = vmatprep.subr.mxu0 0.0
        %855 = vmatpush1.msra.mxu0 %v841
        %856 = vmatprep.subr.mxu0 0.0
        %857 = vmatpush1.msra.mxu0 %v842
        %858 = vmatprep.subr.mxu0 0.0
        %859 = vmatpush1.msra.mxu0 %v843
        %860 = vmatprep.subr.mxu0 0.0
        %861 = vmatpush1.msra.mxu0 %v844
        %862 = vmatprep.subr.mxu0 0.0
        %863 = vmatpush1.msra.mxu0 %v845
        %864 = vmatprep.subr.mxu0 0.0
        %865 = vmatpush1.msra.mxu0 %v846
        %866 = vmatprep.subr.mxu0 0.0
        %867 = vmatpush1.msra.mxu0 0.0
        %868 = vmatprep.subr.mxu0 0.0
        %869 = vmatpush1.msra.mxu0 0.0
        %870 = vmatprep.subr.mxu0 0.0
        %871 = vmatpush1.msra.mxu0 0.0
        %872 = vmatprep.subr.mxu0 0.0
        %873 = vmatpush1.msra.mxu0 0.0
        %874 = vmatprep.subr.mxu0 0.0
        %875 = vmatpush1.msra.mxu0 0.0
        %876 = vmatprep.subr.mxu0 0.0
        %877 = vmatpush1.msra.mxu0 0.0
        %878 = vmatprep.subr.mxu0 0.0
        %879 = vmatpush1.msra.mxu0 0.0
        %880 = vmatprep.subr.mxu0 0.0
        %881 = vmatpush1.msra.mxu0 0.0
        %882 = vmatprep.subr.mxu0 0.0
        %883 = vmatpush1.msra.mxu0 0.0
        %884 = vmatprep.subr.mxu0 0.0
        %885 = vmatpush1.msra.mxu0 0.0
        %886 = vmatprep.subr.mxu0 0.0
        %887 = vmatpush1.msra.mxu0 0.0
        %888 = vmatprep.subr.mxu0 0.0
        %889 = vmatpush1.msra.mxu0 0.0
        %890 = vmatprep.subr.mxu0 0.0
        %891 = vmatpush1.msra.mxu0 0.0
        %892 = vmatprep.subr.mxu0 0.0
        %893 = vmatpush1.msra.mxu0 0.0
        %894 = vmatprep.subr.mxu0 0.0
        %895 = vmatpush1.msra.mxu0 0.0
        %896 = vmatprep.subr.mxu0 0.0
        %897 = vmatpush1.msra.mxu0 0.0
        %898 = vmatprep.subr.mxu0 0.0
        %899 = vmatpush1.msra.mxu0 0.0
        %900 = vmatprep.subr.mxu0 0.0
        %901 = vmatpush1.msra.mxu0 0.0
        %902 = vmatprep.subr.mxu0 0.0
        %903 = vmatpush1.msra.mxu0 0.0
        %904 = vmatprep.subr.mxu0 0.0
        %905 = vmatpush1.msra.mxu0 0.0
        %906 = vmatprep.subr.mxu0 0.0
        %907 = vmatpush1.msra.mxu0 0.0
        %908 = vmatprep.subr.mxu0 0.0
        %909 = vmatpush1.msra.mxu0 0.0
        %910 = vmatprep.subr.mxu0 0.0
        %911 = vmatpush1.msra.mxu0 0.0
        %912 = vmatprep.subr.mxu0 0.0
        %913 = vmatpush1.msra.mxu0 0.0
        %914 = vmatprep.mubr.f32.mxu0 0.0
        %915 = vmatmul.mubr.f32.gmra.mrb[0].mxu0 %v848
        %v916 = vpop.f32.mrb[0].mxu0
        %v917 = vadd.f32 0.0, %v916
        %v918 = vpop.f32.mrb[0].mxu0
        %919 = vdwg.mxu0
        %920 = vmax.xlane.f32.xlu0 %v917
        %v921 = vpop.xlane.xlu0 %920
        %v922 = vsub.f32 %v917, %v921
        %v923 = vmul.f32 %v922, 1.442695
        %v924 = vpow.pop %v923
        %925 = vadd.xlane.f32.xlu0 %v924
        %v926 = vpop.xlane.xlu0 %925
        %v927 = vrcp.pop %v926
        %v928 = vmul.f32 %v927, 32.0
        %v929 = vmul.f32 %v924, %v928
        %v930 = vmul.f32 %v744, %v929
        %931 = vmatprep.subr.mxu0 0.0
        %932 = vmatpush1.msra.mxu0 %v470
        %933 = vmatprep.subr.mxu0 0.0
        %934 = vmatpush1.msra.mxu0 %v471
        %935 = vmatprep.subr.mxu0 0.0
        %936 = vmatpush1.msra.mxu0 %v472
        %937 = vmatprep.subr.mxu0 0.0
        %938 = vmatpush1.msra.mxu0 %v473
        %939 = vmatprep.subr.mxu0 0.0
        %940 = vmatpush1.msra.mxu0 %v474
        %941 = vmatprep.subr.mxu0 0.0
        %942 = vmatpush1.msra.mxu0 %v475
        %943 = vmatprep.subr.mxu0 0.0
        %944 = vmatpush1.msra.mxu0 %v476
        %945 = vmatprep.subr.mxu0 0.0
        %946 = vmatpush1.msra.mxu0 %v477
        %947 = vmatprep.subr.mxu0 0.0
        %948 = vmatpush1.msra.mxu0 %v478
        %949 = vmatprep.subr.mxu0 0.0
        %950 = vmatpush1.msra.mxu0 %v479
        %951 = vmatprep.subr.mxu0 0.0
        %952 = vmatpush1.msra.mxu0 %v480
        %953 = vmatprep.subr.mxu0 0.0
        %954 = vmatpush1.msra.mxu0 %v481
        %955 = vmatprep.subr.mxu0 0.0
        %956 = vmatpush1.msra.mxu0 %v482
        %957 = vmatprep.subr.mxu0 0.0
        %958 = vmatpush1.msra.mxu0 %v483
        %959 = vmatprep.subr.mxu0 0.0
        %960 = vmatpush1.msra.mxu0 %v484
        %961 = vmatprep.subr.mxu0 0.0
        %962 = vmatpush1.msra.mxu0 %v485
        %963 = vmatprep.subr.mxu0 0.0
        %964 = vmatpush1.msra.mxu0 0.0
        %965 = vmatprep.subr.mxu0 0.0
        %966 = vmatpush1.msra.mxu0 0.0
        %967 = vmatprep.subr.mxu0 0.0
        %968 = vmatpush1.msra.mxu0 0.0
        %969 = vmatprep.subr.mxu0 0.0
        %970 = vmatpush1.msra.mxu0 0.0
        %971 = vmatprep.subr.mxu0 0.0
        %972 = vmatpush1.msra.mxu0 0.0
        %973 = vmatprep.subr.mxu0 0.0
        %974 = vmatpush1.msra.mxu0 0.0
        %975 = vmatprep.subr.mxu0 0.0
        %976 = vmatpush1.msra.mxu0 0.0
        %977 = vmatprep.subr.mxu0 0.0
        %978 = vmatpush1.msra.mxu0 0.0
        %979 = vmatprep.subr.mxu0 0.0
        %980 = vmatpush1.msra.mxu0 0.0
        %981 = vmatprep.subr.mxu0 0.0
        %982 = vmatpush1.msra.mxu0 0.0
        %983 = vmatprep.subr.mxu0 0.0
        %984 = vmatpush1.msra.mxu0 0.0
        %985 = vmatprep.subr.mxu0 0.0
        %986 = vmatpush1.msra.mxu0 0.0
        %987 = vmatprep.subr.mxu0 0.0
        %988 = vmatpush1.msra.mxu0 0.0
        %989 = vmatprep.subr.mxu0 0.0
        %990 = vmatpush1.msra.mxu0 0.0
        %991 = vmatprep.subr.mxu0 0.0
        %992 = vmatpush1.msra.mxu0 0.0
        %993 = vmatprep.subr.mxu0 0.0
        %994 = vmatpush1.msra.mxu0 0.0
        %995 = vmatprep.mubr.f32.mxu0 0.0
        %996 = vmatmul.mubr.f32.gmra.mrb[0].mxu0 %v930
        %v997 = vpop.f32.mrb[0].mxu0
        %v998 = vadd.f32 0.0, %v997
        %v999 = vpop.f32.mrb[0].mxu0
        %1000 = vdwg.mxu0
        %v1001 = vmul.f32 %v741, %v998
        %v1002 = vld [vmem:[%s10] sm:$0xff]
        %v1003 = vld [vmem:[%s10 + $0x8] sm:$0xff]
        %v1004 = vld [vmem:[%s10 + $0x10] sm:$0xff]
        %v1005 = vld [vmem:[%s10 + $0x18] sm:$0xff]
        %v1006 = vld [vmem:[%s10 + $0x20] sm:$0xff]
        %v1007 = vld [vmem:[%s10 + $0x28] sm:$0xff]
        %v1008 = vld [vmem:[%s10 + $0x30] sm:$0xff]
        %v1009 = vld [vmem:[%s10 + $0x38] sm:$0xff]
        %v1010 = vld [vmem:[%s11] sm:$0xff]
        %v1011 = vld [vmem:[%s11 + $0x8] sm:$0xff]
        %v1012 = vld [vmem:[%s11 + $0x10] sm:$0xff]
        %v1013 = vld [vmem:[%s11 + $0x18] sm:$0xff]
        %v1014 = vld [vmem:[%s461] sm:$0xff]
        %vm1015 = vcmask 261120
        %v1017 = vsel %vm1015, %v1001, 0
        %1019 = vmatprep.subr.mxu0 0.0
        %1020 = vmatpush1.msra.mxu0 %v1010
        %1021 = vmatprep.subr.mxu0 0.0
        %1022 = vmatpush1.msra.mxu0 %v1011
        %1023 = vmatprep.subr.mxu0 0.0
        %1024 = vmatpush1.msra.mxu0 %v1012
        %1025 = vmatprep.subr.mxu0 0.0
        %1026 = vmatpush1.msra.mxu0 %v1013
        %1027 = vmatprep.subr.mxu0 0.0
        %1028 = vmatpush1.msra.mxu0 0.0
        %1029 = vmatprep.subr.mxu0 0.0
        %1030 = vmatpush1.msra.mxu0 0.0
        %1031 = vmatprep.subr.mxu0 0.0
        %1032 = vmatpush1.msra.mxu0 0.0
        %1033 = vmatprep.subr.mxu0 0.0
        %1034 = vmatpush1.msra.mxu0 0.0
        %1035 = vmatprep.subr.mxu0 0.0
        %1036 = vmatpush1.msra.mxu0 0.0
        %1037 = vmatprep.subr.mxu0 0.0
        %1038 = vmatpush1.msra.mxu0 0.0
        %1039 = vmatprep.subr.mxu0 0.0
        %1040 = vmatpush1.msra.mxu0 0.0
        %1041 = vmatprep.subr.mxu0 0.0
        %1042 = vmatpush1.msra.mxu0 0.0
        %1043 = vmatprep.subr.mxu0 0.0
        %1044 = vmatpush1.msra.mxu0 0.0
        %1045 = vmatprep.subr.mxu0 0.0
        %1046 = vmatpush1.msra.mxu0 0.0
        %1047 = vmatprep.subr.mxu0 0.0
        %1048 = vmatpush1.msra.mxu0 0.0
        %1049 = vmatprep.subr.mxu0 0.0
        %1050 = vmatpush1.msra.mxu0 0.0
        %1051 = vmatprep.subr.mxu0 0.0
        %1052 = vmatpush1.msra.mxu0 0.0
        %1053 = vmatprep.subr.mxu0 0.0
        %1054 = vmatpush1.msra.mxu0 0.0
        %1055 = vmatprep.subr.mxu0 0.0
        %1056 = vmatpush1.msra.mxu0 0.0
        %1057 = vmatprep.subr.mxu0 0.0
        %1058 = vmatpush1.msra.mxu0 0.0
        %1059 = vmatprep.subr.mxu0 0.0
        %1060 = vmatpush1.msra.mxu0 0.0
        %1061 = vmatprep.subr.mxu0 0.0
        %1062 = vmatpush1.msra.mxu0 0.0
        %1063 = vmatprep.subr.mxu0 0.0
        %1064 = vmatpush1.msra.mxu0 0.0
        %1065 = vmatprep.subr.mxu0 0.0
        %1066 = vmatpush1.msra.mxu0 0.0
        %1067 = vmatprep.subr.mxu0 0.0
        %1068 = vmatpush1.msra.mxu0 0.0
        %1069 = vmatprep.subr.mxu0 0.0
        %1070 = vmatpush1.msra.mxu0 0.0
        %1071 = vmatprep.subr.mxu0 0.0
        %1072 = vmatpush1.msra.mxu0 0.0
        %1073 = vmatprep.subr.mxu0 0.0
        %1074 = vmatpush1.msra.mxu0 0.0
        %1075 = vmatprep.subr.mxu0 0.0
        %1076 = vmatpush1.msra.mxu0 0.0
        %1077 = vmatprep.subr.mxu0 0.0
        %1078 = vmatpush1.msra.mxu0 0.0
        %1079 = vmatprep.subr.mxu0 0.0
        %1080 = vmatpush1.msra.mxu0 0.0
        %1081 = vmatprep.subr.mxu0 0.0
        %1082 = vmatpush1.msra.mxu0 0.0
        %1083 = vmatprep.mubr.f32.mxu0 0.0
        %1084 = vmatmul.mubr.f32.gmra.mrb[0].mxu0 %v1017
        %v1085 = vpop.f32.mrb[0].mxu0
        %v1086 = vadd.f32 0.0, %v1085
        %v1087 = vpop.f32.mrb[0].mxu0
        %1088 = vdwg.mxu0
        %v1090 = vsel %vm589, %v1014, 0
        %1092 = vmatprep.subr.mxu0 0.0
        %1093 = vmatpush1.msra.mxu0 %v1002
        %1094 = vmatprep.subr.mxu0 0.0
        %1095 = vmatpush1.msra.mxu0 %v1003
        %1096 = vmatprep.subr.mxu0 0.0
        %1097 = vmatpush1.msra.mxu0 %v1004
        %1098 = vmatprep.subr.mxu0 0.0
        %1099 = vmatpush1.msra.mxu0 %v1005
        %1100 = vmatprep.subr.mxu0 0.0
        %1101 = vmatpush1.msra.mxu0 %v1006
        %1102 = vmatprep.subr.mxu0 0.0
        %1103 = vmatpush1.msra.mxu0 %v1007
        %1104 = vmatprep.subr.mxu0 0.0
        %1105 = vmatpush1.msra.mxu0 %v1008
        %1106 = vmatprep.subr.mxu0 0.0
        %1107 = vmatpush1.msra.mxu0 %v1009
        %1108 = vmatprep.subr.mxu0 0.0
        %1109 = vmatpush1.msra.mxu0 0.0
        %1110 = vmatprep.subr.mxu0 0.0
        %1111 = vmatpush1.msra.mxu0 0.0
        %1112 = vmatprep.subr.mxu0 0.0
        %1113 = vmatpush1.msra.mxu0 0.0
        %1114 = vmatprep.subr.mxu0 0.0
        %1115 = vmatpush1.msra.mxu0 0.0
        %1116 = vmatprep.subr.mxu0 0.0
        %1117 = vmatpush1.msra.mxu0 0.0
        %1118 = vmatprep.subr.mxu0 0.0
        %1119 = vmatpush1.msra.mxu0 0.0
        %1120 = vmatprep.subr.mxu0 0.0
        %1121 = vmatpush1.msra.mxu0 0.0
        %1122 = vmatprep.subr.mxu0 0.0
        %1123 = vmatpush1.msra.mxu0 0.0
        %1124 = vmatprep.subr.mxu0 0.0
        %1125 = vmatpush1.msra.mxu0 0.0
        %1126 = vmatprep.subr.mxu0 0.0
        %1127 = vmatpush1.msra.mxu0 0.0
        %1128 = vmatprep.subr.mxu0 0.0
        %1129 = vmatpush1.msra.mxu0 0.0
        %1130 = vmatprep.subr.mxu0 0.0
        %1131 = vmatpush1.msra.mxu0 0.0
        %1132 = vmatprep.subr.mxu0 0.0
        %1133 = vmatpush1.msra.mxu0 0.0
        %1134 = vmatprep.subr.mxu0 0.0
        %1135 = vmatpush1.msra.mxu0 0.0
        %1136 = vmatprep.subr.mxu0 0.0
        %1137 = vmatpush1.msra.mxu0 0.0
        %1138 = vmatprep.subr.mxu0 0.0
        %1139 = vmatpush1.msra.mxu0 0.0
        %1140 = vmatprep.subr.mxu0 0.0
        %1141 = vmatpush1.msra.mxu0 0.0
        %1142 = vmatprep.subr.mxu0 0.0
        %1143 = vmatpush1.msra.mxu0 0.0
        %1144 = vmatprep.subr.mxu0 0.0
        %1145 = vmatpush1.msra.mxu0 0.0
        %1146 = vmatprep.subr.mxu0 0.0
        %1147 = vmatpush1.msra.mxu0 0.0
        %1148 = vmatprep.subr.mxu0 0.0
        %1149 = vmatpush1.msra.mxu0 0.0
        %1150 = vmatprep.subr.mxu0 0.0
        %1151 = vmatpush1.msra.mxu0 0.0
        %1152 = vmatprep.subr.mxu0 0.0
        %1153 = vmatpush1.msra.mxu0 0.0
        %1154 = vmatprep.subr.mxu0 0.0
        %1155 = vmatpush1.msra.mxu0 0.0
        %1156 = vmatprep.mubr.f32.mxu0 0.0
        %1157 = vmatmul.mubr.f32.gmra.mrb[0].mxu0 %v1090
        %v1158 = vpop.f32.mrb[0].mxu0
        %v1159 = vadd.f32 %v1086, %v1158
        %v1160 = vpop.f32.mrb[0].mxu0
        %1161 = vdwg.mxu0
        %v1162 = vld [vmem:[%s12] sm:$0x1]
        %v1164 = vlaneseq
        %v1165 = vshrl.u32 %v1164, 7
        %v1166 = vsub.s32 0, %v1165
        %v1167 = vrot.slane %v1162, %v1166
        %v1169 = vadd.f32 %v1159, %v1167
        %1170 = vst [vmem:[%s457] sm:$0xff] %v1169
        %s1171 = sand.u32 %s323, 1
        %s1172 = scalar_lea.sflag [#allocation3], %s1171
        %s1173 = sand.u32 %s323, 1
        %s1174 = smul.addr %s1173, 8
        %s1175 = scalar_lea.vmem [#allocation2], %s1174
        // Predicated region
        $region73: #{tpu_custom_call.1} parent=71 // pred_check
          %p1176 = pneg %p333
        $region74: #{tpu_custom_call.1} parent=71 // pred_check_branch
          %1178 = sbr.rel (%p1176) target = $region76
        $region75: #{tpu_custom_call.1} parent=71 // pred_region
          %s1180 = ssub.s32 128, 128
          %1181 = vsyncadd %s1172, %s1180
          %s1182 = smul.addr %s27, 128
          %s1183 = scalar_lea.hbm %s13, %s1182
          %s1185 = sshll.u32 %s1175, 4
          %s1186 = int_to_ptr.vmem [resolvable:$true] %s1185
          %1188 = dma.vmem_to_hbm [thread:$0]  %s1186, 128, %s1183, %s1172
        $region76: #{tpu_custom_call.1} parent=71 // pred_fallthru
          _
      $region72: #{tpu_custom_call.1} parent=5 // pred_fallthru
        _
      %p1189 = scmp.le.s32.totalorder 2, %s22
      // Predicated region
      $region77: #{tpu_custom_call.1} parent=5 // pred_check
        %p1190 = pneg %p1189
      $region78: #{tpu_custom_call.1} parent=5 // pred_check_branch
        %1192 = sbr.rel (%p1190) target = $region80
      $region79: #{tpu_custom_call.1} parent=5 // pred_region
        %s1193 = ssub.s32 %s22, 2
        // Predicated region
        $region81: #{tpu_custom_call.1} parent=79 // pred_check
          %p1194 = pneg %p339
        $region82: #{tpu_custom_call.1} parent=79 // pred_check_branch
          %1196 = sbr.rel (%p1194) target = $region84
        $region83: #{tpu_custom_call.1} parent=79 // pred_region
          %s1197 = sand.u32 %s324, 1
          %s1198 = scalar_lea.sflag [#allocation3], %s1197
          %s1199 = sand.u32 %s324, 1
          %s1200 = smul.addr %s1199, 8
          %s1201 = scalar_lea.vmem [#allocation2], %s1200
          %1202 = dma.done %s1198, 128
        $region84: #{tpu_custom_call.1} parent=79 // pred_fallthru
          _
      $region80: #{tpu_custom_call.1} parent=5 // pred_fallthru
        _
    $region6: #{tpu_custom_call.1} parent=1 // loop_footer
      %s26 = sadd.s32 1, %s22
    $region7: #{tpu_custom_call.1} parent=1 // loop_footer_branch
      %21 = sbr.rel target = $region3
    $region8: #{tpu_custom_call.1} parent=1 // loop_exit
      _
    %1203 = vsyncpa [#allocation3], 1
    %s1204 = scalar_lea.sflag [#allocation3], 1
    %1205 = vsyncpa %s1204, 1

</llo_original>
